<compile_context>
chip_gen: v6e
topology: v6e:2x2x1
jax: 0.10.0
libtpu: 0.0.40
codegen_flags: <defaults>
</compile_context>

<pallas_src>
import functools

import jax
import jax.numpy as jnp
from jax.experimental import pallas as pl
from jax.experimental.pallas import tpu as pltpu

C = 192            # channels fixed by the module definition
N, H, W = 1, 28, 28


def _default_num_ctiles():
    """Channel-tile count heuristic (see header comment)."""
    try:
        kind = jax.devices()[0].device_kind.lower()
    except Exception:
        return 2
    if "v6" in kind:
        return 1          # single TC + fast HBM: one block, one grid step
    return 2              # v7x: megacore sharding; v5e/older: DMA overlap


def _tanh_chain_kernel(x_ref, p_ref, o_ref):
    # x_ref: (TILE_C, H*W) f32    p_ref: (TILE_C, 8) f32, cols 0..3 = w, 4..7 = b
    # o_ref: (TILE_C, H*W) f32
    x = x_ref[...]
    # Four depthwise-1x1-conv + tanh stages: per-channel affine broadcast across
    # the spatial/lane axis, all in f32 (the kernel is HBM-bound; f32 is free).
    for layer in range(4):
        w = p_ref[:, layer:layer + 1]        # (TILE_C, 1) static column view
        b = p_ref[:, 4 + layer:5 + layer]    # (TILE_C, 1)
        x = jnp.tanh(x * w + b)
    o_ref[...] = x


def pack_params(weights, biases):
    """(4, C) weights/biases -> channels-first packed (C, 8) f32 params."""
    return jnp.concatenate([weights.T, biases.T], axis=1).astype(jnp.float32)


def model_tanh_forward(x_nchw, params_cf, *, num_ctiles=None, donate_input=False):
    """x_nchw: (N, C, H, W) float32.  params_cf: (C, 8) float32 (packed)."""
    n, c, h, w = x_nchw.shape
    assert c == C
    hw = h * w
    if num_ctiles is None:
        num_ctiles = _default_num_ctiles()
    assert C % num_ctiles == 0
    tile_c = C // num_ctiles
    assert tile_c % 8 == 0

    # Free reshape of the contiguous NCHW buffer: channels-first 2D slab.
    x2d = x_nchw.reshape(n * c, hw)

    cost = pl.CostEstimate(
        flops=8 * n * C * hw,                 # 4 stages x (mul + add)
        transcendentals=4 * n * C * hw,       # 4 tanh per element
        bytes_accessed=2 * n * C * hw * 4,    # read + write of the f32 slab
    )

    kwargs = {}
    if donate_input:
        # Output reuses the input's HBM buffer (only safe if x is dead after).
        kwargs["input_output_aliases"] = {0: 0}

    out2d = pl.pallas_call(
        _tanh_chain_kernel,
        out_shape=jax.ShapeDtypeStruct(x2d.shape, x2d.dtype),
        grid_spec=pltpu.PrefetchScalarGridSpec(
            num_scalar_prefetch=0,
            grid=(n, num_ctiles),
            in_specs=[
                pl.BlockSpec((tile_c, hw),
                             functools.partial(
                                 lambda b, i, nct: (b * nct + i, 0),
                                 nct=num_ctiles)),
                pl.BlockSpec((tile_c, 8), lambda b, i: (i, 0)),
            ],
            out_specs=pl.BlockSpec((tile_c, hw),
                                   functools.partial(
                                       lambda b, i, nct: (b * nct + i, 0),
                                       nct=num_ctiles)),
        ),
        compiler_params=pltpu.CompilerParams(
            dimension_semantics=("parallel", "parallel")),
        cost_estimate=cost,
        **kwargs,
    )(x2d, params_cf)

    # Free reshape back to NCHW.
    return out2d.reshape(n, c, h, w)


def _init_params(key):
    # Deterministic init mimicking PyTorch Conv2d default:
    # uniform(-bound, bound), bound = 1/sqrt(fan_in), fan_in = 1 (depthwise 1x1).
    kw, kb = jax.random.split(key)
    bound = 1.0
    weights = jax.random.uniform(kw, (4, C), jnp.float32, -bound, bound)
    biases = jax.random.uniform(kb, (4, C), jnp.float32, -bound, bound)
    return weights, biases


if __name__ == "__main__":
    key = jax.random.PRNGKey(0)
    kx, kp = jax.random.split(key)
    x1 = jax.random.uniform(kx, (N, C, H, W), jnp.float32)
    weights, biases = _init_params(kp)
    params_cf = pack_params(weights, biases)

    out = model_tanh_forward(x1, params_cf)
    out = jax.block_until_ready(out)

    # Pure-JAX f32 reference.
    ref = x1
    for layer in range(4):
        wl = weights[layer].reshape(1, C, 1, 1)
        bl = biases[layer].reshape(1, C, 1, 1)
        ref = jnp.tanh(ref * wl + bl)

    assert out.shape == (N, C, H, W)
    assert jnp.allclose(out, ref, atol=1e-5, rtol=1e-5)

    print("KERNEL_OK")
</pallas_src>

<mosaic_0001>
module attributes {stable_mosaic.version = 11 : i64} {
  func.func @_tanh_chain_kernel(%arg0: i32, %arg1: i32, %arg2: memref<96x784xf32, #tpu.memory_space<vmem>>, %arg3: memref<96x8xf32, #tpu.memory_space<vmem>>, %arg4: memref<96x784xf32, #tpu.memory_space<vmem>>) attributes {dimension_semantics = [#tpu.dimension_semantics<parallel>, #tpu.dimension_semantics<parallel>], iteration_bounds = array<i64: 1, 2>, scalar_prefetch = 0 : i64, scratch_operands = 0 : i64, tpu.core_type = #tpu.core_type<tc>, window_params = [{transform_indices = @transform_0, window_bounds = array<i64: 96, 784>}, {transform_indices = @transform_1, window_bounds = array<i64: 96, 8>}, {transform_indices = @transform_2, window_bounds = array<i64: 96, 784>}]} {
    %c0 = arith.constant 0 : index
    %c0_0 = arith.constant 0 : index
    %0 = vector.load %arg2[%c0, %c0_0] : memref<96x784xf32, #tpu.memory_space<vmem>>, vector<96x784xf32>
    %c0_1 = arith.constant 0 : index
    %c0_2 = arith.constant 0 : index
    %1 = vector.load %arg3[%c0_1, %c0_2] : memref<96x8xf32, #tpu.memory_space<vmem>>, vector<96x1xf32>
    %c0_3 = arith.constant 0 : index
    %c4 = arith.constant 4 : index
    %2 = vector.load %arg3[%c0_3, %c4] : memref<96x8xf32, #tpu.memory_space<vmem>>, vector<96x1xf32>
    %3 = vector.broadcast %1 : vector<96x1xf32> to vector<96x784xf32>
    %4 = arith.mulf %0, %3 : vector<96x784xf32>
    %5 = vector.broadcast %2 : vector<96x1xf32> to vector<96x784xf32>
    %6 = arith.addf %4, %5 : vector<96x784xf32>
    %7 = math.tanh %6 : vector<96x784xf32>
    %c0_4 = arith.constant 0 : index
    %c1 = arith.constant 1 : index
    %8 = vector.load %arg3[%c0_4, %c1] : memref<96x8xf32, #tpu.memory_space<vmem>>, vector<96x1xf32>
    %c0_5 = arith.constant 0 : index
    %c5 = arith.constant 5 : index
    %9 = vector.load %arg3[%c0_5, %c5] : memref<96x8xf32, #tpu.memory_space<vmem>>, vector<96x1xf32>
    %10 = vector.broadcast %8 : vector<96x1xf32> to vector<96x784xf32>
    %11 = arith.mulf %7, %10 : vector<96x784xf32>
    %12 = vector.broadcast %9 : vector<96x1xf32> to vector<96x784xf32>
    %13 = arith.addf %11, %12 : vector<96x784xf32>
    %14 = math.tanh %13 : vector<96x784xf32>
    %c0_6 = arith.constant 0 : index
    %c2 = arith.constant 2 : index
    %15 = vector.load %arg3[%c0_6, %c2] : memref<96x8xf32, #tpu.memory_space<vmem>>, vector<96x1xf32>
    %c0_7 = arith.constant 0 : index
    %c6 = arith.constant 6 : index
    %16 = vector.load %arg3[%c0_7, %c6] : memref<96x8xf32, #tpu.memory_space<vmem>>, vector<96x1xf32>
    %17 = vector.broadcast %15 : vector<96x1xf32> to vector<96x784xf32>
    %18 = arith.mulf %14, %17 : vector<96x784xf32>
    %19 = vector.broadcast %16 : vector<96x1xf32> to vector<96x784xf32>
    %20 = arith.addf %18, %19 : vector<96x784xf32>
    %21 = math.tanh %20 : vector<96x784xf32>
    %c0_8 = arith.constant 0 : index
    %c3 = arith.constant 3 : index
    %22 = vector.load %arg3[%c0_8, %c3] : memref<96x8xf32, #tpu.memory_space<vmem>>, vector<96x1xf32>
    %c0_9 = arith.constant 0 : index
    %c7 = arith.constant 7 : index
    %23 = vector.load %arg3[%c0_9, %c7] : memref<96x8xf32, #tpu.memory_space<vmem>>, vector<96x1xf32>
    %24 = vector.broadcast %22 : vector<96x1xf32> to vector<96x784xf32>
    %25 = arith.mulf %21, %24 : vector<96x784xf32>
    %26 = vector.broadcast %23 : vector<96x1xf32> to vector<96x784xf32>
    %27 = arith.addf %25, %26 : vector<96x784xf32>
    %28 = math.tanh %27 : vector<96x784xf32>
    %c0_10 = arith.constant 0 : index
    %c0_11 = arith.constant 0 : index
    %29 = vector.load %arg4[%c0_10, %c0_11] : memref<96x784xf32, #tpu.memory_space<vmem>>, vector<96x784xf32>
    tpu.vector_store %arg4[%c0_10, %c0_11], %28 {strides = array<i32>} : memref<96x784xf32, #tpu.memory_space<vmem>>, vector<96x784xf32>,
    return
  }
  func.func @transform_0(%arg0: i32, %arg1: i32) -> (i32, i32) {
    %c2_i32 = arith.constant 2 : i32
    %0 = arith.muli %arg0, %c2_i32 : i32
    %1 = arith.addi %0, %arg1 : i32
    %c0_i32 = arith.constant 0 : i32
    %c0_i32_0 = arith.constant 0 : i32
    return %1, %c0_i32 : i32, i32
  }
  func.func @transform_1(%arg0: i32, %arg1: i32) -> (i32, i32) {
    %c0_i32 = arith.constant 0 : i32
    %c0_i32_0 = arith.constant 0 : i32
    return %arg1, %c0_i32 : i32, i32
  }
  func.func @transform_2(%arg0: i32, %arg1: i32) -> (i32, i32) {
    %c2_i32 = arith.constant 2 : i32
    %0 = arith.muli %arg0, %c2_i32 : i32
    %1 = arith.addi %0, %arg1 : i32
    %c0_i32 = arith.constant 0 : i32
    %c0_i32_0 = arith.constant 0 : i32
    return %1, %c0_i32 : i32, i32
  }
}

</mosaic_0001>

<llo_original>
// kernel: tpu_custom_call.1
$region0: #{tpu_custom_call.1}
  #allocation0 [shape = 'u32[]', space=smem, size = 0x4, offset = 0x4, fixed_abs, tag = 'smem constant byte address 0x4 - core index']
  #allocation1 [shape = 'u32[144,128]{1,0:T(1,128)}', space=vmem, size = 0x12000, scoped, tag = 'internal scratch']
  %s0 = inlined_call_operand.hbm [shape: f32[192,784], index: 0, kind: input, shape index: {}]
  %s1 = inlined_call_operand.vmem [shape: f32[192,8], index: 1, kind: input, shape index: {}]
  %s2 = inlined_call_operand.hbm [shape: f32[192,784], index: 2, kind: output, shape index: {}]
  %s3 = sld [smem:[#allocation0]]
  $region45: #{tpu_custom_call.1} parent=0
    _
  %s5 = ssub.s32 1, %s3
  %s6 = scalar_select 0, %s5, %s3
  $region1: #{tpu_custom_call.1} parent=0
    #allocation2 [shape = 'u8[688128]{0}', space=vmem, size = 0xa8000, scoped, tag = 'input window, operand 0']
    #allocation3 [shape = 's32[2]{0}', space=sflag, size = 0x8, scoped, tag = 'scoped memory for tpu_custom_call.1']
    #allocation4 [shape = 's32[2]{0}', space=sflag, size = 0x8, scoped, tag = 'scoped memory for tpu_custom_call.1']
    #allocation5 [shape = 'u8[688128]{0}', space=vmem, size = 0xa8000, scoped, tag = 'output window, operand 0']
    %7 = vsyncpa [#allocation3], 0
    %s8 = scalar_lea.sflag [#allocation3], 1
    %9 = vsyncpa %s8, 0
    %10 = vsyncpa [#allocation4], 0
    %s11 = scalar_lea.sflag [#allocation4], 1
    %12 = vsyncpa %s11, 0
    loop: start=0, step=1, limit=4
    $region2: #{tpu_custom_call.1} parent=1 // loop_pre_header
      _
    $region3: #{tpu_custom_call.1} parent=1 // loop_header
      %s14 = sphi 0, %s18
      %p15 = scmp.ge.s32.totalorder %s14, 4
      %s21 = sphi 0, %s33
      %s22 = sphi 0, %s29
      %s23 = sphi 0, %s21
      %s24 = sphi 0, %s22
      %s25 = sphi 0, %s23
      %s26 = sphi 0, %s24
      %s40 = sphi 0, %s42
      %s43 = sphi 0, %s40
      %s44 = sphi 0, %s43
      %s60 = sphi 0, %s44
      %s66 = sphi 0, %s68
      %s69 = sphi 0, %s66
      %s70 = sphi 0, %s69
      %s86 = sphi 0, %s70
      %s96 = sphi 0, %s98
      %s99 = sphi 0, %s96
      %s100 = sphi 0, %s99
      %s116 = sphi 0, %s100
    $region4: #{tpu_custom_call.1} parent=1 // loop_header_branch
      %17 = sbr.rel (%p15) target = $region8
    $region5: #{tpu_custom_call.1} parent=1 // loop_body
      %s19 = ssub.s32 %s14, 1
      %s20 = ssub.s32 %s14, 2
      %s27 = sadd.s32 1, %s22
      %p28 = scmp.ge.s32.totalorder %s27, 2
      %s29 = scalar_select %p28, 0, %s27
      %s30 = sadd.s32 1, %s21
      %s31 = scalar_select %p28, %s30, %s21
      %p32 = scmp.ge.s32.totalorder %s31, 1
      %s33 = scalar_select %p32, 0, %s31
      %s34 = smul.u32 %s21, 2
      %s35 = sadd.s32 %s34, %s22
      %s36 = smul.u32 %s33, 2
      %s37 = sadd.s32 %s36, %s29
      %s38 = ssub.s32 %s35, %s37
      %p39 = scmp.eq.s32.totalorder %s38, 0
      %s41 = sadd.s32 %s40, 1
      %s42 = scalar_select %p39, %s40, %s41
      %p45 = pneg %p39
      %p46 = scmp.eq.s32.totalorder %s14, 1
      %p47 = por %p45, %p46
      %p48 = scmp.ne.s32.totalorder %s40, %s43
      %p49 = scmp.eq.s32.totalorder %s14, 0
      %p50 = por %p48, %p49
      %p51 = scmp.ne.s32.totalorder %s40, %s43
      %p52 = scmp.eq.s32.totalorder %s19, 1
      %p53 = por %p51, %p52
      %p54 = scmp.ne.s32.totalorder %s43, %s44
      %p55 = scmp.eq.s32.totalorder %s19, 0
      %p56 = por %p54, %p55
      %p57 = scmp.ne.s32.totalorder %s43, %s44
      %p58 = scmp.eq.s32.totalorder %s20, 1
      %p59 = por %p57, %p58
      %p61 = scmp.ne.s32.totalorder %s44, %s60
      %p62 = scmp.eq.s32.totalorder %s20, 0
      %p63 = por %p61, %p62
      %s64 = ssub.s32 %s22, %s29
      %p65 = scmp.eq.s32.totalorder %s64, 0
      %s67 = sadd.s32 %s66, 1
      %s68 = scalar_select %p65, %s66, %s67
      %p71 = pneg %p65
      %p72 = scmp.eq.s32.totalorder %s14, 1
      %p73 = por %p71, %p72
      %p74 = scmp.ne.s32.totalorder %s66, %s69
      %p75 = scmp.eq.s32.totalorder %s14, 0
      %p76 = por %p74, %p75
      %p77 = scmp.ne.s32.totalorder %s66, %s69
      %p78 = scmp.eq.s32.totalorder %s19, 1
      %p79 = por %p77, %p78
      %p80 = scmp.ne.s32.totalorder %s69, %s70
      %p81 = scmp.eq.s32.totalorder %s19, 0
      %p82 = por %p80, %p81
      %p83 = scmp.ne.s32.totalorder %s69, %s70
      %p84 = scmp.eq.s32.totalorder %s20, 1
      %p85 = por %p83, %p84
      %p87 = scmp.ne.s32.totalorder %s70, %s86
      %p88 = scmp.eq.s32.totalorder %s20, 0
      %p89 = por %p87, %p88
      %s90 = smul.u32 %s21, 2
      %s91 = sadd.s32 %s90, %s22
      %s92 = smul.u32 %s33, 2
      %s93 = sadd.s32 %s92, %s29
      %s94 = ssub.s32 %s91, %s93
      %p95 = scmp.eq.s32.totalorder %s94, 0
      %s97 = sadd.s32 %s96, 1
      %s98 = scalar_select %p95, %s96, %s97
      %p101 = pneg %p95
      %p102 = scmp.eq.s32.totalorder %s14, 1
      %p103 = por %p101, %p102
      %p104 = scmp.ne.s32.totalorder %s96, %s99
      %p105 = scmp.eq.s32.totalorder %s14, 0
      %p106 = por %p104, %p105
      %p107 = scmp.ne.s32.totalorder %s96, %s99
      %p108 = scmp.eq.s32.totalorder %s19, 1
      %p109 = por %p107, %p108
      %p110 = scmp.ne.s32.totalorder %s99, %s100
      %p111 = scmp.eq.s32.totalorder %s19, 0
      %p112 = por %p110, %p111
      %p113 = scmp.ne.s32.totalorder %s99, %s100
      %p114 = scmp.eq.s32.totalorder %s20, 1
      %p115 = por %p113, %p114
      %p117 = scmp.ne.s32.totalorder %s100, %s116
      %p118 = scmp.eq.s32.totalorder %s20, 0
      %p119 = por %p117, %p118
      %p120 = scmp.le.s32.totalorder 1, %s14
      %p121 = scmp.lt.s32.totalorder %s14, 3
      %p122 = pnand %p120, %p121
      %p123 = pneg %p122
      // Predicated region
      $region9: #{tpu_custom_call.1} parent=5 // pred_check
        _
      $region10: #{tpu_custom_call.1} parent=5 // pred_check_branch
        %125 = sbr.rel (%p122) target = $region12
      $region11: #{tpu_custom_call.1} parent=5 // pred_region
        %s126 = ssub.s32 %s14, 1
      $region12: #{tpu_custom_call.1} parent=5 // pred_fallthru
        _
      %p127 = scmp.lt.s32.totalorder %s14, 2
      // Predicated region
      $region13: #{tpu_custom_call.1} parent=5 // pred_check
        %p128 = pneg %p127
      $region14: #{tpu_custom_call.1} parent=5 // pred_check_branch
        %130 = sbr.rel (%p128) target = $region16
      $region15: #{tpu_custom_call.1} parent=5 // pred_region
        // Predicated region
        $region17: #{tpu_custom_call.1} parent=15 // pred_check
          %p131 = pneg %p50
        $region18: #{tpu_custom_call.1} parent=15 // pred_check_branch
          %133 = sbr.rel (%p131) target = $region20
        $region19: #{tpu_custom_call.1} parent=15 // pred_region
          %s134 = sand.u32 %s40, 1
          %s135 = scalar_lea.sflag [#allocation3], %s134
          %s136 = sand.u32 %s40, 1
          %s137 = smul.addr %s136, 672
          %s138 = scalar_lea.vmem [#allocation2], %s137
          %s139 = smul.u32 %s21, 2
          %s140 = sadd.s32 %s139, %s22
          %s141 = smul.u32 12, %s140
          %s143 = ssub.s32 10752, 10752
          %144 = vsyncadd %s135, %s143
          %s145 = smul.addr %s141, 7
          %s146 = smul.addr %s145, 128
          %s147 = scalar_lea.hbm %s0, %s146
          %s148 = sshll.u32 %s138, 4
          %s149 = int_to_ptr.vmem [resolvable:$true] %s148
          %154 = dma.hbm_to_vmem [thread:$0]  %s147, 10752, %s149, %s135, 896, 896, 56
        $region20: #{tpu_custom_call.1} parent=15 // pred_fallthru
          _
        // Predicated region
        $region21: #{tpu_custom_call.1} parent=15 // pred_check
          %p155 = pneg %p76
        $region22: #{tpu_custom_call.1} parent=15 // pred_check_branch
          %157 = sbr.rel (%p155) target = $region24
        $region23: #{tpu_custom_call.1} parent=15 // pred_region
          %s158 = smul.u32 12, %s22
          %p159 = scmp.lt.s32.totalorder %s158, 23
          %s160 = scalar_select %p159, %s158, 23
          %s161 = smul.addr %s160, 8
          %s162 = scalar_lea.vmem %s1, %s161
          %s163 = smul.u32 12, %s22
        $region24: #{tpu_custom_call.1} parent=15 // pred_fallthru
          _
      $region16: #{tpu_custom_call.1} parent=5 // pred_fallthru
        _
      %p164 = scmp.le.s32.totalorder 1, %s14
      %p165 = scmp.lt.s32.totalorder %s14, 3
      %p166 = pnand %p164, %p165
      %p167 = pneg %p166
      // Predicated region
      $region25: #{tpu_custom_call.1} parent=5 // pred_check
        _
      $region26: #{tpu_custom_call.1} parent=5 // pred_check_branch
        %169 = sbr.rel (%p166) target = $region28
      $region27: #{tpu_custom_call.1} parent=5 // pred_region
        %s170 = ssub.s32 %s14, 1
        %s171 = sand.u32 %s43, 1
        %s172 = scalar_lea.sflag [#allocation3], %s171
        %s173 = sand.u32 %s43, 1
        %s174 = smul.addr %s173, 672
        %s175 = scalar_lea.vmem [#allocation2], %s174
        // Predicated region
        $region29: #{tpu_custom_call.1} parent=27 // pred_check
          %p176 = pneg %p56
        $region30: #{tpu_custom_call.1} parent=27 // pred_check_branch
          %178 = sbr.rel (%p176) target = $region32
        $region31: #{tpu_custom_call.1} parent=27 // pred_region
          %179 = dma.done %s172, 10752
        $region32: #{tpu_custom_call.1} parent=27 // pred_fallthru
          _
        %s180 = sand.u32 %s43, 1
        %s181 = scalar_lea.sflag [#allocation3], %s180
        %s182 = sand.u32 %s43, 1
        %s183 = smul.addr %s182, 672
        %s184 = scalar_lea.vmem [#allocation2], %s183
        %p185 = pneg %p56
        %p186 = pneg %p53
        %s187 = smul.u32 12, %s24
        %p188 = scmp.lt.s32.totalorder %s187, 23
        %s189 = scalar_select %p188, %s187, 23
        %s190 = smul.addr %s189, 8
        %s191 = scalar_lea.vmem %s1, %s190
        %p192 = pneg %p82
        %p193 = pneg %p79
        %p194 = pneg %p112
        %p195 = pneg %p109
        %s196 = sand.u32 %s99, 1
        %s197 = scalar_lea.sflag [#allocation4], %s196
        %s198 = sand.u32 %s99, 1
        %s199 = smul.addr %s198, 672
        %s200 = scalar_lea.vmem [#allocation5], %s199
        %s201 = smul.u32 %s23, 2
        %s202 = sadd.s32 %s201, %s24
        %s203 = smul.u32 12, %s202
        %s204 = smul.u32 12, %s24
        %p205 = scmp.lt.s32.totalorder %s204, 23
        %s206 = scalar_select %p205, %s204, 23
        %s207 = smul.addr %s206, 8
        %s208 = scalar_lea.vmem %s1, %s207
        %s209 = smul.u32 12, %s24
        %s210 = smul.u32 %s23, 2
        %s211 = sadd.s32 %s210, %s24
        %s212 = smul.u32 12, %s211
        %v213 = vld [vmem:[%s175] sm:$0xff]
        %v214 = vld [vmem:[%s175 + $0x8] sm:$0xff]
        %v215 = vld [vmem:[%s175 + $0x10] sm:$0xff]
        %v216 = vld [vmem:[%s175 + $0x18] sm:$0xff]
        %v217 = vld [vmem:[%s175 + $0x20] sm:$0xff]
        %v218 = vld [vmem:[%s175 + $0x28] sm:$0xff]
        %v219 = vld [vmem:[%s175 + $0x30] sm:$0xff]
        %v220 = vld [vmem:[%s175 + $0x38] sm:$0xff]
        %v221 = vld [vmem:[%s175 + $0x40] sm:$0xff]
        %v222 = vld [vmem:[%s175 + $0x48] sm:$0xff]
        %v223 = vld [vmem:[%s175 + $0x50] sm:$0xff]
        %v224 = vld [vmem:[%s175 + $0x58] sm:$0xff]
        %v225 = vld [vmem:[%s175 + $0x60] sm:$0xff]
        %v226 = vld [vmem:[%s175 + $0x68] sm:$0xff]
        %v227 = vld [vmem:[%s175 + $0x70] sm:$0xff]
        %v228 = vld [vmem:[%s175 + $0x78] sm:$0xff]
        %v229 = vld [vmem:[%s175 + $0x80] sm:$0xff]
        %v230 = vld [vmem:[%s175 + $0x88] sm:$0xff]
        %v231 = vld [vmem:[%s175 + $0x90] sm:$0xff]
        %v232 = vld [vmem:[%s175 + $0x98] sm:$0xff]
        %v233 = vld [vmem:[%s175 + $0xa0] sm:$0xff]
        %v234 = vld [vmem:[%s175 + $0xa8] sm:$0xff]
        %v235 = vld [vmem:[%s175 + $0xb0] sm:$0xff]
        %v236 = vld [vmem:[%s175 + $0xb8] sm:$0xff]
        %v237 = vld [vmem:[%s175 + $0xc0] sm:$0xff]
        %v238 = vld [vmem:[%s175 + $0xc8] sm:$0xff]
        %v239 = vld [vmem:[%s175 + $0xd0] sm:$0xff]
        %v240 = vld [vmem:[%s175 + $0xd8] sm:$0xff]
        %v241 = vld [vmem:[%s175 + $0xe0] sm:$0xff]
        %v242 = vld [vmem:[%s175 + $0xe8] sm:$0xff]
        %v243 = vld [vmem:[%s175 + $0xf0] sm:$0xff]
        %v244 = vld [vmem:[%s175 + $0xf8] sm:$0xff]
        %v245 = vld [vmem:[%s175 + $0x100] sm:$0xff]
        %v246 = vld [vmem:[%s175 + $0x108] sm:$0xff]
        %v247 = vld [vmem:[%s175 + $0x110] sm:$0xff]
        %v248 = vld [vmem:[%s175 + $0x118] sm:$0xff]
        %v249 = vld [vmem:[%s175 + $0x120] sm:$0xff]
        %v250 = vld [vmem:[%s175 + $0x128] sm:$0xff]
        %v251 = vld [vmem:[%s175 + $0x130] sm:$0xff]
        %v252 = vld [vmem:[%s175 + $0x138] sm:$0xff]
        %v253 = vld [vmem:[%s175 + $0x140] sm:$0xff]
        %v254 = vld [vmem:[%s175 + $0x148] sm:$0xff]
        %v255 = vld [vmem:[%s175 + $0x150] sm:$0xff]
        %v256 = vld [vmem:[%s175 + $0x158] sm:$0xff]
        %v257 = vld [vmem:[%s175 + $0x160] sm:$0xff]
        %v258 = vld [vmem:[%s175 + $0x168] sm:$0xff]
        %v259 = vld [vmem:[%s175 + $0x170] sm:$0xff]
        %v260 = vld [vmem:[%s175 + $0x178] sm:$0xff]
        %v261 = vld [vmem:[%s175 + $0x180] sm:$0xff]
        %v262 = vld [vmem:[%s175 + $0x188] sm:$0xff]
        %v263 = vld [vmem:[%s175 + $0x190] sm:$0xff]
        %v264 = vld [vmem:[%s175 + $0x198] sm:$0xff]
        %v265 = vld [vmem:[%s175 + $0x1a0] sm:$0xff]
        %v266 = vld [vmem:[%s175 + $0x1a8] sm:$0xff]
        %v267 = vld [vmem:[%s175 + $0x1b0] sm:$0xff]
        %v268 = vld [vmem:[%s175 + $0x1b8] sm:$0xff]
        %v269 = vld [vmem:[%s175 + $0x1c0] sm:$0xff]
        %v270 = vld [vmem:[%s175 + $0x1c8] sm:$0xff]
        %v271 = vld [vmem:[%s175 + $0x1d0] sm:$0xff]
        %v272 = vld [vmem:[%s175 + $0x1d8] sm:$0xff]
        %v273 = vld [vmem:[%s175 + $0x1e0] sm:$0xff]
        %v274 = vld [vmem:[%s175 + $0x1e8] sm:$0xff]
        %v275 = vld [vmem:[%s175 + $0x1f0] sm:$0xff]
        %v276 = vld [vmem:[%s175 + $0x1f8] sm:$0xff]
        %v277 = vld [vmem:[%s175 + $0x200] sm:$0xff]
        %v278 = vld [vmem:[%s175 + $0x208] sm:$0xff]
        %v279 = vld [vmem:[%s175 + $0x210] sm:$0xff]
        %v280 = vld [vmem:[%s175 + $0x218] sm:$0xff]
        %v281 = vld [vmem:[%s175 + $0x220] sm:$0xff]
        %v282 = vld [vmem:[%s175 + $0x228] sm:$0xff]
        %v283 = vld [vmem:[%s175 + $0x230] sm:$0xff]
        %v284 = vld [vmem:[%s175 + $0x238] sm:$0xff]
        %v285 = vld [vmem:[%s175 + $0x240] sm:$0xff]
        %v286 = vld [vmem:[%s175 + $0x248] sm:$0xff]
        %v287 = vld [vmem:[%s175 + $0x250] sm:$0xff]
        %v288 = vld [vmem:[%s175 + $0x258] sm:$0xff]
        %v289 = vld [vmem:[%s175 + $0x260] sm:$0xff]
        %v290 = vld [vmem:[%s175 + $0x268] sm:$0xff]
        %v291 = vld [vmem:[%s175 + $0x270] sm:$0xff]
        %v292 = vld [vmem:[%s175 + $0x278] sm:$0xff]
        %v293 = vld [vmem:[%s175 + $0x280] sm:$0xff]
        %v294 = vld [vmem:[%s175 + $0x288] sm:$0xff]
        %v295 = vld [vmem:[%s175 + $0x290] sm:$0xff]
        %v296 = vld [vmem:[%s175 + $0x298] sm:$0xff]
        %v297 = vld [vmem:[%s208] sm:$0xff]
        %v298 = vld [vmem:[%s208 + $0x8] sm:$0xff]
        %v299 = vld [vmem:[%s208 + $0x10] sm:$0xff]
        %v300 = vld [vmem:[%s208 + $0x18] sm:$0xff]
        %v301 = vld [vmem:[%s208 + $0x20] sm:$0xff]
        %v302 = vld [vmem:[%s208 + $0x28] sm:$0xff]
        %v303 = vld [vmem:[%s208 + $0x30] sm:$0xff]
        %v304 = vld [vmem:[%s208 + $0x38] sm:$0xff]
        %v305 = vld [vmem:[%s208 + $0x40] sm:$0xff]
        %v306 = vld [vmem:[%s208 + $0x48] sm:$0xff]
        %v307 = vld [vmem:[%s208 + $0x50] sm:$0xff]
        %v308 = vld [vmem:[%s208 + $0x58] sm:$0xff]
        %310 = vset.pattern.permute.xlu0 0
        %311 = vperm.xlu0 %310, %v297
        %v312 = vpop.permute.xlu0 %311
        %315 = vset.pattern.permute.xlu0 0
        %316 = vperm.xlu0 %315, %v298
        %v317 = vpop.permute.xlu0 %316
        %320 = vset.pattern.permute.xlu0 0
        %321 = vperm.xlu0 %320, %v299
        %v322 = vpop.permute.xlu0 %321
        %325 = vset.pattern.permute.xlu0 0
        %326 = vperm.xlu0 %325, %v300
        %v327 = vpop.permute.xlu0 %326
        %330 = vset.pattern.permute.xlu0 0
        %331 = vperm.xlu0 %330, %v301
        %v332 = vpop.permute.xlu0 %331
        %335 = vset.pattern.permute.xlu0 0
        %336 = vperm.xlu0 %335, %v302
        %v337 = vpop.permute.xlu0 %336
        %340 = vset.pattern.permute.xlu0 0
        %341 = vperm.xlu0 %340, %v303
        %v342 = vpop.permute.xlu0 %341
        %345 = vset.pattern.permute.xlu0 0
        %346 = vperm.xlu0 %345, %v304
        %v347 = vpop.permute.xlu0 %346
        %350 = vset.pattern.permute.xlu0 0
        %351 = vperm.xlu0 %350, %v305
        %v352 = vpop.permute.xlu0 %351
        %355 = vset.pattern.permute.xlu0 0
        %356 = vperm.xlu0 %355, %v306
        %v357 = vpop.permute.xlu0 %356
        %360 = vset.pattern.permute.xlu0 0
        %361 = vperm.xlu0 %360, %v307
        %v362 = vpop.permute.xlu0 %361
        %365 = vset.pattern.permute.xlu0 0
        %366 = vperm.xlu0 %365, %v308
        %v367 = vpop.permute.xlu0 %366
        %v369 = vmul.f32 %v213, %v312
        %v370 = vmul.f32 %v214, %v312
        %v371 = vmul.f32 %v215, %v312
        %v372 = vmul.f32 %v216, %v312
        %v373 = vmul.f32 %v217, %v312
        %v374 = vmul.f32 %v218, %v312
        %v375 = vmul.f32 %v219, %v312
        %v376 = vmul.f32 %v220, %v317
        %v377 = vmul.f32 %v221, %v317
        %v378 = vmul.f32 %v222, %v317
        %v379 = vmul.f32 %v223, %v317
        %v380 = vmul.f32 %v224, %v317
        %v381 = vmul.f32 %v225, %v317
        %v382 = vmul.f32 %v226, %v317
        %v383 = vmul.f32 %v227, %v322
        %v384 = vmul.f32 %v228, %v322
        %v385 = vmul.f32 %v229, %v322
        %v386 = vmul.f32 %v230, %v322
        %v387 = vmul.f32 %v231, %v322
        %v388 = vmul.f32 %v232, %v322
        %v389 = vmul.f32 %v233, %v322
        %v390 = vmul.f32 %v234, %v327
        %v391 = vmul.f32 %v235, %v327
        %v392 = vmul.f32 %v236, %v327
        %v393 = vmul.f32 %v237, %v327
        %v394 = vmul.f32 %v238, %v327
        %v395 = vmul.f32 %v239, %v327
        %v396 = vmul.f32 %v240, %v327
        %v397 = vmul.f32 %v241, %v332
        %v398 = vmul.f32 %v242, %v332
        %v399 = vmul.f32 %v243, %v332
        %v400 = vmul.f32 %v244, %v332
        %v401 = vmul.f32 %v245, %v332
        %v402 = vmul.f32 %v246, %v332
        %v403 = vmul.f32 %v247, %v332
        %v404 = vmul.f32 %v248, %v337
        %v405 = vmul.f32 %v249, %v337
        %v406 = vmul.f32 %v250, %v337
        %v407 = vmul.f32 %v251, %v337
        %v408 = vmul.f32 %v252, %v337
        %v409 = vmul.f32 %v253, %v337
        %v410 = vmul.f32 %v254, %v337
        %v411 = vmul.f32 %v255, %v342
        %v412 = vmul.f32 %v256, %v342
        %v413 = vmul.f32 %v257, %v342
        %v414 = vmul.f32 %v258, %v342
        %v415 = vmul.f32 %v259, %v342
        %v416 = vmul.f32 %v260, %v342
        %v417 = vmul.f32 %v261, %v342
        %v418 = vmul.f32 %v262, %v347
        %v419 = vmul.f32 %v263, %v347
        %v420 = vmul.f32 %v264, %v347
        %v421 = vmul.f32 %v265, %v347
        %v422 = vmul.f32 %v266, %v347
        %v423 = vmul.f32 %v267, %v347
        %v424 = vmul.f32 %v268, %v347
        %v425 = vmul.f32 %v269, %v352
        %v426 = vmul.f32 %v270, %v352
        %v427 = vmul.f32 %v271, %v352
        %v428 = vmul.f32 %v272, %v352
        %v429 = vmul.f32 %v273, %v352
        %v430 = vmul.f32 %v274, %v352
        %v431 = vmul.f32 %v275, %v352
        %v432 = vmul.f32 %v276, %v357
        %v433 = vmul.f32 %v277, %v357
        %v434 = vmul.f32 %v278, %v357
        %v435 = vmul.f32 %v279, %v357
        %v436 = vmul.f32 %v280, %v357
        %v437 = vmul.f32 %v281, %v357
        %v438 = vmul.f32 %v282, %v357
        %v439 = vmul.f32 %v283, %v362
        %v440 = vmul.f32 %v284, %v362
        %v441 = vmul.f32 %v285, %v362
        %v442 = vmul.f32 %v286, %v362
        %v443 = vmul.f32 %v287, %v362
        %v444 = vmul.f32 %v288, %v362
        %v445 = vmul.f32 %v289, %v362
        %v446 = vmul.f32 %v290, %v367
        %v447 = vmul.f32 %v291, %v367
        %v448 = vmul.f32 %v292, %v367
        %v449 = vmul.f32 %v293, %v367
        %v450 = vmul.f32 %v294, %v367
        %v451 = vmul.f32 %v295, %v367
        %v452 = vmul.f32 %v296, %v367
        %453 = vset.pattern.permute.xlu0 4
        %454 = vperm.xlu0 %453, %v297
        %v455 = vpop.permute.xlu0 %454
        %457 = vset.pattern.permute.xlu0 4
        %458 = vperm.xlu0 %457, %v298
        %v459 = vpop.permute.xlu0 %458
        %461 = vset.pattern.permute.xlu0 4
        %462 = vperm.xlu0 %461, %v299
        %v463 = vpop.permute.xlu0 %462
        %465 = vset.pattern.permute.xlu0 4
        %466 = vperm.xlu0 %465, %v300
        %v467 = vpop.permute.xlu0 %466
        %469 = vset.pattern.permute.xlu0 4
        %470 = vperm.xlu0 %469, %v301
        %v471 = vpop.permute.xlu0 %470
        %473 = vset.pattern.permute.xlu0 4
        %474 = vperm.xlu0 %473, %v302
        %v475 = vpop.permute.xlu0 %474
        %477 = vset.pattern.permute.xlu0 4
        %478 = vperm.xlu0 %477, %v303
        %v479 = vpop.permute.xlu0 %478
        %481 = vset.pattern.permute.xlu0 4
        %482 = vperm.xlu0 %481, %v304
        %v483 = vpop.permute.xlu0 %482
        %485 = vset.pattern.permute.xlu0 4
        %486 = vperm.xlu0 %485, %v305
        %v487 = vpop.permute.xlu0 %486
        %489 = vset.pattern.permute.xlu0 4
        %490 = vperm.xlu0 %489, %v306
        %v491 = vpop.permute.xlu0 %490
        %493 = vset.pattern.permute.xlu0 4
        %494 = vperm.xlu0 %493, %v307
        %v495 = vpop.permute.xlu0 %494
        %497 = vset.pattern.permute.xlu0 4
        %498 = vperm.xlu0 %497, %v308
        %v499 = vpop.permute.xlu0 %498
        %v501 = vadd.f32 %v369, %v455
        %v502 = vadd.f32 %v370, %v455
        %v503 = vadd.f32 %v371, %v455
        %v504 = vadd.f32 %v372, %v455
        %v505 = vadd.f32 %v373, %v455
        %v506 = vadd.f32 %v374, %v455
        %v507 = vadd.f32 %v375, %v455
        %v508 = vadd.f32 %v376, %v459
        %v509 = vadd.f32 %v377, %v459
        %v510 = vadd.f32 %v378, %v459
        %v511 = vadd.f32 %v379, %v459
        %v512 = vadd.f32 %v380, %v459
        %v513 = vadd.f32 %v381, %v459
        %v514 = vadd.f32 %v382, %v459
        %v515 = vadd.f32 %v383, %v463
        %v516 = vadd.f32 %v384, %v463
        %v517 = vadd.f32 %v385, %v463
        %v518 = vadd.f32 %v386, %v463
        %v519 = vadd.f32 %v387, %v463
        %v520 = vadd.f32 %v388, %v463
        %v521 = vadd.f32 %v389, %v463
        %v522 = vadd.f32 %v390, %v467
        %v523 = vadd.f32 %v391, %v467
        %v524 = vadd.f32 %v392, %v467
        %v525 = vadd.f32 %v393, %v467
        %v526 = vadd.f32 %v394, %v467
        %v527 = vadd.f32 %v395, %v467
        %v528 = vadd.f32 %v396, %v467
        %v529 = vadd.f32 %v397, %v471
        %v530 = vadd.f32 %v398, %v471
        %v531 = vadd.f32 %v399, %v471
        %v532 = vadd.f32 %v400, %v471
        %v533 = vadd.f32 %v401, %v471
        %v534 = vadd.f32 %v402, %v471
        %v535 = vadd.f32 %v403, %v471
        %v536 = vadd.f32 %v404, %v475
        %v537 = vadd.f32 %v405, %v475
        %v538 = vadd.f32 %v406, %v475
        %v539 = vadd.f32 %v407, %v475
        %v540 = vadd.f32 %v408, %v475
        %v541 = vadd.f32 %v409, %v475
        %v542 = vadd.f32 %v410, %v475
        %v543 = vadd.f32 %v411, %v479
        %v544 = vadd.f32 %v412, %v479
        %v545 = vadd.f32 %v413, %v479
        %v546 = vadd.f32 %v414, %v479
        %v547 = vadd.f32 %v415, %v479
        %v548 = vadd.f32 %v416, %v479
        %v549 = vadd.f32 %v417, %v479
        %v550 = vadd.f32 %v418, %v483
        %v551 = vadd.f32 %v419, %v483
        %v552 = vadd.f32 %v420, %v483
        %v553 = vadd.f32 %v421, %v483
        %v554 = vadd.f32 %v422, %v483
        %v555 = vadd.f32 %v423, %v483
        %v556 = vadd.f32 %v424, %v483
        %v557 = vadd.f32 %v425, %v487
        %v558 = vadd.f32 %v426, %v487
        %v559 = vadd.f32 %v427, %v487
        %v560 = vadd.f32 %v428, %v487
        %v561 = vadd.f32 %v429, %v487
        %v562 = vadd.f32 %v430, %v487
        %v563 = vadd.f32 %v431, %v487
        %v564 = vadd.f32 %v432, %v491
        %v565 = vadd.f32 %v433, %v491
        %v566 = vadd.f32 %v434, %v491
        %v567 = vadd.f32 %v435, %v491
        %v568 = vadd.f32 %v436, %v491
        %v569 = vadd.f32 %v437, %v491
        %v570 = vadd.f32 %v438, %v491
        %v571 = vadd.f32 %v439, %v495
        %v572 = vadd.f32 %v440, %v495
        %v573 = vadd.f32 %v441, %v495
        %v574 = vadd.f32 %v442, %v495
        %v575 = vadd.f32 %v443, %v495
        %v576 = vadd.f32 %v444, %v495
        %v577 = vadd.f32 %v445, %v495
        %v578 = vadd.f32 %v446, %v499
        %v579 = vadd.f32 %v447, %v499
        %v580 = vadd.f32 %v448, %v499
        %v581 = vadd.f32 %v449, %v499
        %v582 = vadd.f32 %v450, %v499
        %v583 = vadd.f32 %v451, %v499
        %v584 = vadd.f32 %v452, %v499
        %v585 = vtanh.pop %v501
        %v586 = vtanh.pop %v502
        %v587 = vtanh.pop %v503
        %v588 = vtanh.pop %v504
        %v589 = vtanh.pop %v505
        %v590 = vtanh.pop %v506
        %v591 = vtanh.pop %v507
        %v592 = vtanh.pop %v508
        %v593 = vtanh.pop %v509
        %v594 = vtanh.pop %v510
        %v595 = vtanh.pop %v511
        %v596 = vtanh.pop %v512
        %v597 = vtanh.pop %v513
        %v598 = vtanh.pop %v514
        %v599 = vtanh.pop %v515
        %v600 = vtanh.pop %v516
        %v601 = vtanh.pop %v517
        %v602 = vtanh.pop %v518
        %v603 = vtanh.pop %v519
        %v604 = vtanh.pop %v520
        %v605 = vtanh.pop %v521
        %v606 = vtanh.pop %v522
        %v607 = vtanh.pop %v523
        %v608 = vtanh.pop %v524
        %v609 = vtanh.pop %v525
        %v610 = vtanh.pop %v526
        %v611 = vtanh.pop %v527
        %v612 = vtanh.pop %v528
        %v613 = vtanh.pop %v529
        %v614 = vtanh.pop %v530
        %v615 = vtanh.pop %v531
        %v616 = vtanh.pop %v532
        %v617 = vtanh.pop %v533
        %v618 = vtanh.pop %v534
        %v619 = vtanh.pop %v535
        %v620 = vtanh.pop %v536
        %v621 = vtanh.pop %v537
        %v622 = vtanh.pop %v538
        %v623 = vtanh.pop %v539
        %v624 = vtanh.pop %v540
        %v625 = vtanh.pop %v541
        %v626 = vtanh.pop %v542
        %v627 = vtanh.pop %v543
        %v628 = vtanh.pop %v544
        %v629 = vtanh.pop %v545
        %v630 = vtanh.pop %v546
        %v631 = vtanh.pop %v547
        %v632 = vtanh.pop %v548
        %v633 = vtanh.pop %v549
        %v634 = vtanh.pop %v550
        %v635 = vtanh.pop %v551
        %v636 = vtanh.pop %v552
        %v637 = vtanh.pop %v553
        %v638 = vtanh.pop %v554
        %v639 = vtanh.pop %v555
        %v640 = vtanh.pop %v556
        %v641 = vtanh.pop %v557
        %v642 = vtanh.pop %v558
        %v643 = vtanh.pop %v559
        %v644 = vtanh.pop %v560
        %v645 = vtanh.pop %v561
        %v646 = vtanh.pop %v562
        %v647 = vtanh.pop %v563
        %v648 = vtanh.pop %v564
        %v649 = vtanh.pop %v565
        %v650 = vtanh.pop %v566
        %v651 = vtanh.pop %v567
        %v652 = vtanh.pop %v568
        %v653 = vtanh.pop %v569
        %v654 = vtanh.pop %v570
        %v655 = vtanh.pop %v571
        %v656 = vtanh.pop %v572
        %v657 = vtanh.pop %v573
        %v658 = vtanh.pop %v574
        %v659 = vtanh.pop %v575
        %v660 = vtanh.pop %v576
        %v661 = vtanh.pop %v577
        %v662 = vtanh.pop %v578
        %v663 = vtanh.pop %v579
        %v664 = vtanh.pop %v580
        %v665 = vtanh.pop %v581
        %v666 = vtanh.pop %v582
        %v667 = vtanh.pop %v583
        %v668 = vtanh.pop %v584
        %669 = vset.pattern.permute.xlu0 1
        %670 = vperm.xlu0 %669, %v297
        %v671 = vpop.permute.xlu0 %670
        %673 = vset.pattern.permute.xlu0 1
        %674 = vperm.xlu0 %673, %v298
        %v675 = vpop.permute.xlu0 %674
        %677 = vset.pattern.permute.xlu0 1
        %678 = vperm.xlu0 %677, %v299
        %v679 = vpop.permute.xlu0 %678
        %681 = vset.pattern.permute.xlu0 1
        %682 = vperm.xlu0 %681, %v300
        %v683 = vpop.permute.xlu0 %682
        %685 = vset.pattern.permute.xlu0 1
        %686 = vperm.xlu0 %685, %v301
        %v687 = vpop.permute.xlu0 %686
        %689 = vset.pattern.permute.xlu0 1
        %690 = vperm.xlu0 %689, %v302
        %v691 = vpop.permute.xlu0 %690
        %693 = vset.pattern.permute.xlu0 1
        %694 = vperm.xlu0 %693, %v303
        %v695 = vpop.permute.xlu0 %694
        %697 = vset.pattern.permute.xlu0 1
        %698 = vperm.xlu0 %697, %v304
        %v699 = vpop.permute.xlu0 %698
        %701 = vset.pattern.permute.xlu0 1
        %702 = vperm.xlu0 %701, %v305
        %v703 = vpop.permute.xlu0 %702
        %705 = vset.pattern.permute.xlu0 1
        %706 = vperm.xlu0 %705, %v306
        %v707 = vpop.permute.xlu0 %706
        %709 = vset.pattern.permute.xlu0 1
        %710 = vperm.xlu0 %709, %v307
        %v711 = vpop.permute.xlu0 %710
        %713 = vset.pattern.permute.xlu0 1
        %714 = vperm.xlu0 %713, %v308
        %v715 = vpop.permute.xlu0 %714
        %v717 = vmul.f32 %v585, %v671
        %v718 = vmul.f32 %v586, %v671
        %v719 = vmul.f32 %v587, %v671
        %v720 = vmul.f32 %v588, %v671
        %v721 = vmul.f32 %v589, %v671
        %v722 = vmul.f32 %v590, %v671
        %v723 = vmul.f32 %v591, %v671
        %v724 = vmul.f32 %v592, %v675
        %v725 = vmul.f32 %v593, %v675
        %v726 = vmul.f32 %v594, %v675
        %v727 = vmul.f32 %v595, %v675
        %v728 = vmul.f32 %v596, %v675
        %v729 = vmul.f32 %v597, %v675
        %v730 = vmul.f32 %v598, %v675
        %v731 = vmul.f32 %v599, %v679
        %v732 = vmul.f32 %v600, %v679
        %v733 = vmul.f32 %v601, %v679
        %v734 = vmul.f32 %v602, %v679
        %v735 = vmul.f32 %v603, %v679
        %v736 = vmul.f32 %v604, %v679
        %v737 = vmul.f32 %v605, %v679
        %v738 = vmul.f32 %v606, %v683
        %v739 = vmul.f32 %v607, %v683
        %v740 = vmul.f32 %v608, %v683
        %v741 = vmul.f32 %v609, %v683
        %v742 = vmul.f32 %v610, %v683
        %v743 = vmul.f32 %v611, %v683
        %v744 = vmul.f32 %v612, %v683
        %v745 = vmul.f32 %v613, %v687
        %v746 = vmul.f32 %v614, %v687
        %v747 = vmul.f32 %v615, %v687
        %v748 = vmul.f32 %v616, %v687
        %v749 = vmul.f32 %v617, %v687
        %v750 = vmul.f32 %v618, %v687
        %v751 = vmul.f32 %v619, %v687
        %v752 = vmul.f32 %v620, %v691
        %v753 = vmul.f32 %v621, %v691
        %v754 = vmul.f32 %v622, %v691
        %v755 = vmul.f32 %v623, %v691
        %v756 = vmul.f32 %v624, %v691
        %v757 = vmul.f32 %v625, %v691
        %v758 = vmul.f32 %v626, %v691
        %v759 = vmul.f32 %v627, %v695
        %v760 = vmul.f32 %v628, %v695
        %v761 = vmul.f32 %v629, %v695
        %v762 = vmul.f32 %v630, %v695
        %v763 = vmul.f32 %v631, %v695
        %v764 = vmul.f32 %v632, %v695
        %v765 = vmul.f32 %v633, %v695
        %v766 = vmul.f32 %v634, %v699
        %v767 = vmul.f32 %v635, %v699
        %v768 = vmul.f32 %v636, %v699
        %v769 = vmul.f32 %v637, %v699
        %v770 = vmul.f32 %v638, %v699
        %v771 = vmul.f32 %v639, %v699
        %v772 = vmul.f32 %v640, %v699
        %v773 = vmul.f32 %v641, %v703
        %v774 = vmul.f32 %v642, %v703
        %v775 = vmul.f32 %v643, %v703
        %v776 = vmul.f32 %v644, %v703
        %v777 = vmul.f32 %v645, %v703
        %v778 = vmul.f32 %v646, %v703
        %v779 = vmul.f32 %v647, %v703
        %v780 = vmul.f32 %v648, %v707
        %v781 = vmul.f32 %v649, %v707
        %v782 = vmul.f32 %v650, %v707
        %v783 = vmul.f32 %v651, %v707
        %v784 = vmul.f32 %v652, %v707
        %v785 = vmul.f32 %v653, %v707
        %v786 = vmul.f32 %v654, %v707
        %v787 = vmul.f32 %v655, %v711
        %v788 = vmul.f32 %v656, %v711
        %v789 = vmul.f32 %v657, %v711
        %v790 = vmul.f32 %v658, %v711
        %v791 = vmul.f32 %v659, %v711
        %v792 = vmul.f32 %v660, %v711
        %v793 = vmul.f32 %v661, %v711
        %v794 = vmul.f32 %v662, %v715
        %v795 = vmul.f32 %v663, %v715
        %v796 = vmul.f32 %v664, %v715
        %v797 = vmul.f32 %v665, %v715
        %v798 = vmul.f32 %v666, %v715
        %v799 = vmul.f32 %v667, %v715
        %v800 = vmul.f32 %v668, %v715
        %801 = vset.pattern.permute.xlu0 5
        %802 = vperm.xlu0 %801, %v297
        %v803 = vpop.permute.xlu0 %802
        %805 = vset.pattern.permute.xlu0 5
        %806 = vperm.xlu0 %805, %v298
        %v807 = vpop.permute.xlu0 %806
        %809 = vset.pattern.permute.xlu0 5
        %810 = vperm.xlu0 %809, %v299
        %v811 = vpop.permute.xlu0 %810
        %813 = vset.pattern.permute.xlu0 5
        %814 = vperm.xlu0 %813, %v300
        %v815 = vpop.permute.xlu0 %814
        %817 = vset.pattern.permute.xlu0 5
        %818 = vperm.xlu0 %817, %v301
        %v819 = vpop.permute.xlu0 %818
        %821 = vset.pattern.permute.xlu0 5
        %822 = vperm.xlu0 %821, %v302
        %v823 = vpop.permute.xlu0 %822
        %825 = vset.pattern.permute.xlu0 5
        %826 = vperm.xlu0 %825, %v303
        %v827 = vpop.permute.xlu0 %826
        %829 = vset.pattern.permute.xlu0 5
        %830 = vperm.xlu0 %829, %v304
        %v831 = vpop.permute.xlu0 %830
        %833 = vset.pattern.permute.xlu0 5
        %834 = vperm.xlu0 %833, %v305
        %v835 = vpop.permute.xlu0 %834
        %837 = vset.pattern.permute.xlu0 5
        %838 = vperm.xlu0 %837, %v306
        %v839 = vpop.permute.xlu0 %838
        %841 = vset.pattern.permute.xlu0 5
        %842 = vperm.xlu0 %841, %v307
        %v843 = vpop.permute.xlu0 %842
        %845 = vset.pattern.permute.xlu0 5
        %846 = vperm.xlu0 %845, %v308
        %v847 = vpop.permute.xlu0 %846
        %v849 = vadd.f32 %v717, %v803
        %v850 = vadd.f32 %v718, %v803
        %v851 = vadd.f32 %v719, %v803
        %v852 = vadd.f32 %v720, %v803
        %v853 = vadd.f32 %v721, %v803
        %v854 = vadd.f32 %v722, %v803
        %v855 = vadd.f32 %v723, %v803
        %v856 = vadd.f32 %v724, %v807
        %v857 = vadd.f32 %v725, %v807
        %v858 = vadd.f32 %v726, %v807
        %v859 = vadd.f32 %v727, %v807
        %v860 = vadd.f32 %v728, %v807
        %v861 = vadd.f32 %v729, %v807
        %v862 = vadd.f32 %v730, %v807
        %v863 = vadd.f32 %v731, %v811
        %v864 = vadd.f32 %v732, %v811
        %v865 = vadd.f32 %v733, %v811
        %v866 = vadd.f32 %v734, %v811
        %v867 = vadd.f32 %v735, %v811
        %v868 = vadd.f32 %v736, %v811
        %v869 = vadd.f32 %v737, %v811
        %v870 = vadd.f32 %v738, %v815
        %v871 = vadd.f32 %v739, %v815
        %v872 = vadd.f32 %v740, %v815
        %v873 = vadd.f32 %v741, %v815
        %v874 = vadd.f32 %v742, %v815
        %v875 = vadd.f32 %v743, %v815
        %v876 = vadd.f32 %v744, %v815
        %v877 = vadd.f32 %v745, %v819
        %v878 = vadd.f32 %v746, %v819
        %v879 = vadd.f32 %v747, %v819
        %v880 = vadd.f32 %v748, %v819
        %v881 = vadd.f32 %v749, %v819
        %v882 = vadd.f32 %v750, %v819
        %v883 = vadd.f32 %v751, %v819
        %v884 = vadd.f32 %v752, %v823
        %v885 = vadd.f32 %v753, %v823
        %v886 = vadd.f32 %v754, %v823
        %v887 = vadd.f32 %v755, %v823
        %v888 = vadd.f32 %v756, %v823
        %v889 = vadd.f32 %v757, %v823
        %v890 = vadd.f32 %v758, %v823
        %v891 = vadd.f32 %v759, %v827
        %v892 = vadd.f32 %v760, %v827
        %v893 = vadd.f32 %v761, %v827
        %v894 = vadd.f32 %v762, %v827
        %v895 = vadd.f32 %v763, %v827
        %v896 = vadd.f32 %v764, %v827
        %v897 = vadd.f32 %v765, %v827
        %v898 = vadd.f32 %v766, %v831
        %v899 = vadd.f32 %v767, %v831
        %v900 = vadd.f32 %v768, %v831
        %v901 = vadd.f32 %v769, %v831
        %v902 = vadd.f32 %v770, %v831
        %v903 = vadd.f32 %v771, %v831
        %v904 = vadd.f32 %v772, %v831
        %v905 = vadd.f32 %v773, %v835
        %v906 = vadd.f32 %v774, %v835
        %v907 = vadd.f32 %v775, %v835
        %v908 = vadd.f32 %v776, %v835
        %v909 = vadd.f32 %v777, %v835
        %v910 = vadd.f32 %v778, %v835
        %v911 = vadd.f32 %v779, %v835
        %v912 = vadd.f32 %v780, %v839
        %v913 = vadd.f32 %v781, %v839
        %v914 = vadd.f32 %v782, %v839
        %v915 = vadd.f32 %v783, %v839
        %v916 = vadd.f32 %v784, %v839
        %v917 = vadd.f32 %v785, %v839
        %v918 = vadd.f32 %v786, %v839
        %v919 = vadd.f32 %v787, %v843
        %v920 = vadd.f32 %v788, %v843
        %v921 = vadd.f32 %v789, %v843
        %v922 = vadd.f32 %v790, %v843
        %v923 = vadd.f32 %v791, %v843
        %v924 = vadd.f32 %v792, %v843
        %v925 = vadd.f32 %v793, %v843
        %v926 = vadd.f32 %v794, %v847
        %v927 = vadd.f32 %v795, %v847
        %v928 = vadd.f32 %v796, %v847
        %v929 = vadd.f32 %v797, %v847
        %v930 = vadd.f32 %v798, %v847
        %v931 = vadd.f32 %v799, %v847
        %v932 = vadd.f32 %v800, %v847
        %v933 = vtanh.pop %v849
        %v934 = vtanh.pop %v850
        %v935 = vtanh.pop %v851
        %v936 = vtanh.pop %v852
        %v937 = vtanh.pop %v853
        %v938 = vtanh.pop %v854
        %v939 = vtanh.pop %v855
        %v940 = vtanh.pop %v856
        %v941 = vtanh.pop %v857
        %v942 = vtanh.pop %v858
        %v943 = vtanh.pop %v859
        %v944 = vtanh.pop %v860
        %v945 = vtanh.pop %v861
        %v946 = vtanh.pop %v862
        %v947 = vtanh.pop %v863
        %v948 = vtanh.pop %v864
        %v949 = vtanh.pop %v865
        %v950 = vtanh.pop %v866
        %v951 = vtanh.pop %v867
        %v952 = vtanh.pop %v868
        %v953 = vtanh.pop %v869
        %v954 = vtanh.pop %v870
        %v955 = vtanh.pop %v871
        %v956 = vtanh.pop %v872
        %v957 = vtanh.pop %v873
        %v958 = vtanh.pop %v874
        %v959 = vtanh.pop %v875
        %v960 = vtanh.pop %v876
        %v961 = vtanh.pop %v877
        %v962 = vtanh.pop %v878
        %v963 = vtanh.pop %v879
        %v964 = vtanh.pop %v880
        %v965 = vtanh.pop %v881
        %v966 = vtanh.pop %v882
        %v967 = vtanh.pop %v883
        %v968 = vtanh.pop %v884
        %v969 = vtanh.pop %v885
        %v970 = vtanh.pop %v886
        %v971 = vtanh.pop %v887
        %v972 = vtanh.pop %v888
        %v973 = vtanh.pop %v889
        %v974 = vtanh.pop %v890
        %v975 = vtanh.pop %v891
        %v976 = vtanh.pop %v892
        %v977 = vtanh.pop %v893
        %v978 = vtanh.pop %v894
        %v979 = vtanh.pop %v895
        %v980 = vtanh.pop %v896
        %v981 = vtanh.pop %v897
        %v982 = vtanh.pop %v898
        %v983 = vtanh.pop %v899
        %v984 = vtanh.pop %v900
        %v985 = vtanh.pop %v901
        %v986 = vtanh.pop %v902
        %v987 = vtanh.pop %v903
        %v988 = vtanh.pop %v904
        %v989 = vtanh.pop %v905
        %v990 = vtanh.pop %v906
        %v991 = vtanh.pop %v907
        %v992 = vtanh.pop %v908
        %v993 = vtanh.pop %v909
        %v994 = vtanh.pop %v910
        %v995 = vtanh.pop %v911
        %v996 = vtanh.pop %v912
        %v997 = vtanh.pop %v913
        %v998 = vtanh.pop %v914
        %v999 = vtanh.pop %v915
        %v1000 = vtanh.pop %v916
        %v1001 = vtanh.pop %v917
        %v1002 = vtanh.pop %v918
        %v1003 = vtanh.pop %v919
        %v1004 = vtanh.pop %v920
        %v1005 = vtanh.pop %v921
        %v1006 = vtanh.pop %v922
        %v1007 = vtanh.pop %v923
        %v1008 = vtanh.pop %v924
        %v1009 = vtanh.pop %v925
        %v1010 = vtanh.pop %v926
        %v1011 = vtanh.pop %v927
        %v1012 = vtanh.pop %v928
        %v1013 = vtanh.pop %v929
        %v1014 = vtanh.pop %v930
        %v1015 = vtanh.pop %v931
        %v1016 = vtanh.pop %v932
        %1017 = vset.pattern.permute.xlu0 2
        %1018 = vperm.xlu0 %1017, %v297
        %v1019 = vpop.permute.xlu0 %1018
        %1021 = vset.pattern.permute.xlu0 2
        %1022 = vperm.xlu0 %1021, %v298
        %v1023 = vpop.permute.xlu0 %1022
        %1025 = vset.pattern.permute.xlu0 2
        %1026 = vperm.xlu0 %1025, %v299
        %v1027 = vpop.permute.xlu0 %1026
        %1029 = vset.pattern.permute.xlu0 2
        %1030 = vperm.xlu0 %1029, %v300
        %v1031 = vpop.permute.xlu0 %1030
        %1033 = vset.pattern.permute.xlu0 2
        %1034 = vperm.xlu0 %1033, %v301
        %v1035 = vpop.permute.xlu0 %1034
        %1037 = vset.pattern.permute.xlu0 2
        %1038 = vperm.xlu0 %1037, %v302
        %v1039 = vpop.permute.xlu0 %1038
        %1041 = vset.pattern.permute.xlu0 2
        %1042 = vperm.xlu0 %1041, %v303
        %v1043 = vpop.permute.xlu0 %1042
        %1045 = vset.pattern.permute.xlu0 2
        %1046 = vperm.xlu0 %1045, %v304
        %v1047 = vpop.permute.xlu0 %1046
        %1049 = vset.pattern.permute.xlu0 2
        %1050 = vperm.xlu0 %1049, %v305
        %v1051 = vpop.permute.xlu0 %1050
        %1053 = vset.pattern.permute.xlu0 2
        %1054 = vperm.xlu0 %1053, %v306
        %v1055 = vpop.permute.xlu0 %1054
        %1057 = vset.pattern.permute.xlu0 2
        %1058 = vperm.xlu0 %1057, %v307
        %v1059 = vpop.permute.xlu0 %1058
        %1061 = vset.pattern.permute.xlu0 2
        %1062 = vperm.xlu0 %1061, %v308
        %v1063 = vpop.permute.xlu0 %1062
        %v1065 = vmul.f32 %v933, %v1019
        %v1066 = vmul.f32 %v934, %v1019
        %v1067 = vmul.f32 %v935, %v1019
        %v1068 = vmul.f32 %v936, %v1019
        %v1069 = vmul.f32 %v937, %v1019
        %v1070 = vmul.f32 %v938, %v1019
        %v1071 = vmul.f32 %v939, %v1019
        %v1072 = vmul.f32 %v940, %v1023
        %v1073 = vmul.f32 %v941, %v1023
        %v1074 = vmul.f32 %v942, %v1023
        %v1075 = vmul.f32 %v943, %v1023
        %v1076 = vmul.f32 %v944, %v1023
        %v1077 = vmul.f32 %v945, %v1023
        %v1078 = vmul.f32 %v946, %v1023
        %v1079 = vmul.f32 %v947, %v1027
        %v1080 = vmul.f32 %v948, %v1027
        %v1081 = vmul.f32 %v949, %v1027
        %v1082 = vmul.f32 %v950, %v1027
        %v1083 = vmul.f32 %v951, %v1027
        %v1084 = vmul.f32 %v952, %v1027
        %v1085 = vmul.f32 %v953, %v1027
        %v1086 = vmul.f32 %v954, %v1031
        %v1087 = vmul.f32 %v955, %v1031
        %v1088 = vmul.f32 %v956, %v1031
        %v1089 = vmul.f32 %v957, %v1031
        %v1090 = vmul.f32 %v958, %v1031
        %v1091 = vmul.f32 %v959, %v1031
        %v1092 = vmul.f32 %v960, %v1031
        %v1093 = vmul.f32 %v961, %v1035
        %v1094 = vmul.f32 %v962, %v1035
        %v1095 = vmul.f32 %v963, %v1035
        %v1096 = vmul.f32 %v964, %v1035
        %v1097 = vmul.f32 %v965, %v1035
        %v1098 = vmul.f32 %v966, %v1035
        %v1099 = vmul.f32 %v967, %v1035
        %v1100 = vmul.f32 %v968, %v1039
        %v1101 = vmul.f32 %v969, %v1039
        %v1102 = vmul.f32 %v970, %v1039
        %v1103 = vmul.f32 %v971, %v1039
        %v1104 = vmul.f32 %v972, %v1039
        %v1105 = vmul.f32 %v973, %v1039
        %v1106 = vmul.f32 %v974, %v1039
        %v1107 = vmul.f32 %v975, %v1043
        %v1108 = vmul.f32 %v976, %v1043
        %v1109 = vmul.f32 %v977, %v1043
        %v1110 = vmul.f32 %v978, %v1043
        %v1111 = vmul.f32 %v979, %v1043
        %v1112 = vmul.f32 %v980, %v1043
        %v1113 = vmul.f32 %v981, %v1043
        %v1114 = vmul.f32 %v982, %v1047
        %v1115 = vmul.f32 %v983, %v1047
        %v1116 = vmul.f32 %v984, %v1047
        %v1117 = vmul.f32 %v985, %v1047
        %v1118 = vmul.f32 %v986, %v1047
        %v1119 = vmul.f32 %v987, %v1047
        %v1120 = vmul.f32 %v988, %v1047
        %v1121 = vmul.f32 %v989, %v1051
        %v1122 = vmul.f32 %v990, %v1051
        %v1123 = vmul.f32 %v991, %v1051
        %v1124 = vmul.f32 %v992, %v1051
        %v1125 = vmul.f32 %v993, %v1051
        %v1126 = vmul.f32 %v994, %v1051
        %v1127 = vmul.f32 %v995, %v1051
        %v1128 = vmul.f32 %v996, %v1055
        %v1129 = vmul.f32 %v997, %v1055
        %v1130 = vmul.f32 %v998, %v1055
        %v1131 = vmul.f32 %v999, %v1055
        %v1132 = vmul.f32 %v1000, %v1055
        %v1133 = vmul.f32 %v1001, %v1055
        %v1134 = vmul.f32 %v1002, %v1055
        %v1135 = vmul.f32 %v1003, %v1059
        %v1136 = vmul.f32 %v1004, %v1059
        %v1137 = vmul.f32 %v1005, %v1059
        %v1138 = vmul.f32 %v1006, %v1059
        %v1139 = vmul.f32 %v1007, %v1059
        %v1140 = vmul.f32 %v1008, %v1059
        %v1141 = vmul.f32 %v1009, %v1059
        %v1142 = vmul.f32 %v1010, %v1063
        %v1143 = vmul.f32 %v1011, %v1063
        %v1144 = vmul.f32 %v1012, %v1063
        %v1145 = vmul.f32 %v1013, %v1063
        %v1146 = vmul.f32 %v1014, %v1063
        %v1147 = vmul.f32 %v1015, %v1063
        %v1148 = vmul.f32 %v1016, %v1063
        %1149 = vset.pattern.permute.xlu0 6
        %1150 = vperm.xlu0 %1149, %v297
        %v1151 = vpop.permute.xlu0 %1150
        %1153 = vset.pattern.permute.xlu0 6
        %1154 = vperm.xlu0 %1153, %v298
        %v1155 = vpop.permute.xlu0 %1154
        %1157 = vset.pattern.permute.xlu0 6
        %1158 = vperm.xlu0 %1157, %v299
        %v1159 = vpop.permute.xlu0 %1158
        %1161 = vset.pattern.permute.xlu0 6
        %1162 = vperm.xlu0 %1161, %v300
        %v1163 = vpop.permute.xlu0 %1162
        %1165 = vset.pattern.permute.xlu0 6
        %1166 = vperm.xlu0 %1165, %v301
        %v1167 = vpop.permute.xlu0 %1166
        %1169 = vset.pattern.permute.xlu0 6
        %1170 = vperm.xlu0 %1169, %v302
        %v1171 = vpop.permute.xlu0 %1170
        %1173 = vset.pattern.permute.xlu0 6
        %1174 = vperm.xlu0 %1173, %v303
        %v1175 = vpop.permute.xlu0 %1174
        %1177 = vset.pattern.permute.xlu0 6
        %1178 = vperm.xlu0 %1177, %v304
        %v1179 = vpop.permute.xlu0 %1178
        %1181 = vset.pattern.permute.xlu0 6
        %1182 = vperm.xlu0 %1181, %v305
        %v1183 = vpop.permute.xlu0 %1182
        %1185 = vset.pattern.permute.xlu0 6
        %1186 = vperm.xlu0 %1185, %v306
        %v1187 = vpop.permute.xlu0 %1186
        %1189 = vset.pattern.permute.xlu0 6
        %1190 = vperm.xlu0 %1189, %v307
        %v1191 = vpop.permute.xlu0 %1190
        %1193 = vset.pattern.permute.xlu0 6
        %1194 = vperm.xlu0 %1193, %v308
        %v1195 = vpop.permute.xlu0 %1194
        %v1197 = vadd.f32 %v1065, %v1151
        %v1198 = vadd.f32 %v1066, %v1151
        %v1199 = vadd.f32 %v1067, %v1151
        %v1200 = vadd.f32 %v1068, %v1151
        %v1201 = vadd.f32 %v1069, %v1151
        %v1202 = vadd.f32 %v1070, %v1151
        %v1203 = vadd.f32 %v1071, %v1151
        %v1204 = vadd.f32 %v1072, %v1155
        %v1205 = vadd.f32 %v1073, %v1155
        %v1206 = vadd.f32 %v1074, %v1155
        %v1207 = vadd.f32 %v1075, %v1155
        %v1208 = vadd.f32 %v1076, %v1155
        %v1209 = vadd.f32 %v1077, %v1155
        %v1210 = vadd.f32 %v1078, %v1155
        %v1211 = vadd.f32 %v1079, %v1159
        %v1212 = vadd.f32 %v1080, %v1159
        %v1213 = vadd.f32 %v1081, %v1159
        %v1214 = vadd.f32 %v1082, %v1159
        %v1215 = vadd.f32 %v1083, %v1159
        %v1216 = vadd.f32 %v1084, %v1159
        %v1217 = vadd.f32 %v1085, %v1159
        %v1218 = vadd.f32 %v1086, %v1163
        %v1219 = vadd.f32 %v1087, %v1163
        %v1220 = vadd.f32 %v1088, %v1163
        %v1221 = vadd.f32 %v1089, %v1163
        %v1222 = vadd.f32 %v1090, %v1163
        %v1223 = vadd.f32 %v1091, %v1163
        %v1224 = vadd.f32 %v1092, %v1163
        %v1225 = vadd.f32 %v1093, %v1167
        %v1226 = vadd.f32 %v1094, %v1167
        %v1227 = vadd.f32 %v1095, %v1167
        %v1228 = vadd.f32 %v1096, %v1167
        %v1229 = vadd.f32 %v1097, %v1167
        %v1230 = vadd.f32 %v1098, %v1167
        %v1231 = vadd.f32 %v1099, %v1167
        %v1232 = vadd.f32 %v1100, %v1171
        %v1233 = vadd.f32 %v1101, %v1171
        %v1234 = vadd.f32 %v1102, %v1171
        %v1235 = vadd.f32 %v1103, %v1171
        %v1236 = vadd.f32 %v1104, %v1171
        %v1237 = vadd.f32 %v1105, %v1171
        %v1238 = vadd.f32 %v1106, %v1171
        %v1239 = vadd.f32 %v1107, %v1175
        %v1240 = vadd.f32 %v1108, %v1175
        %v1241 = vadd.f32 %v1109, %v1175
        %v1242 = vadd.f32 %v1110, %v1175
        %v1243 = vadd.f32 %v1111, %v1175
        %v1244 = vadd.f32 %v1112, %v1175
        %v1245 = vadd.f32 %v1113, %v1175
        %v1246 = vadd.f32 %v1114, %v1179
        %v1247 = vadd.f32 %v1115, %v1179
        %v1248 = vadd.f32 %v1116, %v1179
        %v1249 = vadd.f32 %v1117, %v1179
        %v1250 = vadd.f32 %v1118, %v1179
        %v1251 = vadd.f32 %v1119, %v1179
        %v1252 = vadd.f32 %v1120, %v1179
        %v1253 = vadd.f32 %v1121, %v1183
        %v1254 = vadd.f32 %v1122, %v1183
        %v1255 = vadd.f32 %v1123, %v1183
        %v1256 = vadd.f32 %v1124, %v1183
        %v1257 = vadd.f32 %v1125, %v1183
        %v1258 = vadd.f32 %v1126, %v1183
        %v1259 = vadd.f32 %v1127, %v1183
        %v1260 = vadd.f32 %v1128, %v1187
        %v1261 = vadd.f32 %v1129, %v1187
        %v1262 = vadd.f32 %v1130, %v1187
        %v1263 = vadd.f32 %v1131, %v1187
        %v1264 = vadd.f32 %v1132, %v1187
        %v1265 = vadd.f32 %v1133, %v1187
        %v1266 = vadd.f32 %v1134, %v1187
        %v1267 = vadd.f32 %v1135, %v1191
        %v1268 = vadd.f32 %v1136, %v1191
        %v1269 = vadd.f32 %v1137, %v1191
        %v1270 = vadd.f32 %v1138, %v1191
        %v1271 = vadd.f32 %v1139, %v1191
        %v1272 = vadd.f32 %v1140, %v1191
        %v1273 = vadd.f32 %v1141, %v1191
        %v1274 = vadd.f32 %v1142, %v1195
        %v1275 = vadd.f32 %v1143, %v1195
        %v1276 = vadd.f32 %v1144, %v1195
        %v1277 = vadd.f32 %v1145, %v1195
        %v1278 = vadd.f32 %v1146, %v1195
        %v1279 = vadd.f32 %v1147, %v1195
        %v1280 = vadd.f32 %v1148, %v1195
        %v1281 = vtanh.pop %v1197
        %v1282 = vtanh.pop %v1198
        %v1283 = vtanh.pop %v1199
        %v1284 = vtanh.pop %v1200
        %v1285 = vtanh.pop %v1201
        %v1286 = vtanh.pop %v1202
        %v1287 = vtanh.pop %v1203
        %v1288 = vtanh.pop %v1204
        %v1289 = vtanh.pop %v1205
        %v1290 = vtanh.pop %v1206
        %v1291 = vtanh.pop %v1207
        %v1292 = vtanh.pop %v1208
        %v1293 = vtanh.pop %v1209
        %v1294 = vtanh.pop %v1210
        %v1295 = vtanh.pop %v1211
        %v1296 = vtanh.pop %v1212
        %v1297 = vtanh.pop %v1213
        %v1298 = vtanh.pop %v1214
        %v1299 = vtanh.pop %v1215
        %v1300 = vtanh.pop %v1216
        %v1301 = vtanh.pop %v1217
        %v1302 = vtanh.pop %v1218
        %v1303 = vtanh.pop %v1219
        %v1304 = vtanh.pop %v1220
        %v1305 = vtanh.pop %v1221
        %v1306 = vtanh.pop %v1222
        %v1307 = vtanh.pop %v1223
        %v1308 = vtanh.pop %v1224
        %v1309 = vtanh.pop %v1225
        %v1310 = vtanh.pop %v1226
        %v1311 = vtanh.pop %v1227
        %v1312 = vtanh.pop %v1228
        %v1313 = vtanh.pop %v1229
        %v1314 = vtanh.pop %v1230
        %v1315 = vtanh.pop %v1231
        %v1316 = vtanh.pop %v1232
        %v1317 = vtanh.pop %v1233
        %v1318 = vtanh.pop %v1234
        %v1319 = vtanh.pop %v1235
        %v1320 = vtanh.pop %v1236
        %v1321 = vtanh.pop %v1237
        %v1322 = vtanh.pop %v1238
        %v1323 = vtanh.pop %v1239
        %v1324 = vtanh.pop %v1240
        %v1325 = vtanh.pop %v1241
        %v1326 = vtanh.pop %v1242
        %v1327 = vtanh.pop %v1243
        %v1328 = vtanh.pop %v1244
        %v1329 = vtanh.pop %v1245
        %v1330 = vtanh.pop %v1246
        %v1331 = vtanh.pop %v1247
        %v1332 = vtanh.pop %v1248
        %v1333 = vtanh.pop %v1249
        %v1334 = vtanh.pop %v1250
        %v1335 = vtanh.pop %v1251
        %v1336 = vtanh.pop %v1252
        %v1337 = vtanh.pop %v1253
        %v1338 = vtanh.pop %v1254
        %v1339 = vtanh.pop %v1255
        %v1340 = vtanh.pop %v1256
        %v1341 = vtanh.pop %v1257
        %v1342 = vtanh.pop %v1258
        %v1343 = vtanh.pop %v1259
        %v1344 = vtanh.pop %v1260
        %v1345 = vtanh.pop %v1261
        %v1346 = vtanh.pop %v1262
        %v1347 = vtanh.pop %v1263
        %v1348 = vtanh.pop %v1264
        %v1349 = vtanh.pop %v1265
        %v1350 = vtanh.pop %v1266
        %v1351 = vtanh.pop %v1267
        %v1352 = vtanh.pop %v1268
        %v1353 = vtanh.pop %v1269
        %v1354 = vtanh.pop %v1270
        %v1355 = vtanh.pop %v1271
        %v1356 = vtanh.pop %v1272
        %v1357 = vtanh.pop %v1273
        %v1358 = vtanh.pop %v1274
        %v1359 = vtanh.pop %v1275
        %v1360 = vtanh.pop %v1276
        %v1361 = vtanh.pop %v1277
        %v1362 = vtanh.pop %v1278
        %v1363 = vtanh.pop %v1279
        %v1364 = vtanh.pop %v1280
        %1365 = vset.pattern.permute.xlu0 3
        %1366 = vperm.xlu0 %1365, %v297
        %v1367 = vpop.permute.xlu0 %1366
        %1369 = vset.pattern.permute.xlu0 3
        %1370 = vperm.xlu0 %1369, %v298
        %v1371 = vpop.permute.xlu0 %1370
        %1373 = vset.pattern.permute.xlu0 3
        %1374 = vperm.xlu0 %1373, %v299
        %v1375 = vpop.permute.xlu0 %1374
        %1377 = vset.pattern.permute.xlu0 3
        %1378 = vperm.xlu0 %1377, %v300
        %v1379 = vpop.permute.xlu0 %1378
        %1381 = vset.pattern.permute.xlu0 3
        %1382 = vperm.xlu0 %1381, %v301
        %v1383 = vpop.permute.xlu0 %1382
        %1385 = vset.pattern.permute.xlu0 3
        %1386 = vperm.xlu0 %1385, %v302
        %v1387 = vpop.permute.xlu0 %1386
        %1389 = vset.pattern.permute.xlu0 3
        %1390 = vperm.xlu0 %1389, %v303
        %v1391 = vpop.permute.xlu0 %1390
        %1393 = vset.pattern.permute.xlu0 3
        %1394 = vperm.xlu0 %1393, %v304
        %v1395 = vpop.permute.xlu0 %1394
        %1397 = vset.pattern.permute.xlu0 3
        %1398 = vperm.xlu0 %1397, %v305
        %v1399 = vpop.permute.xlu0 %1398
        %1401 = vset.pattern.permute.xlu0 3
        %1402 = vperm.xlu0 %1401, %v306
        %v1403 = vpop.permute.xlu0 %1402
        %1405 = vset.pattern.permute.xlu0 3
        %1406 = vperm.xlu0 %1405, %v307
        %v1407 = vpop.permute.xlu0 %1406
        %1409 = vset.pattern.permute.xlu0 3
        %1410 = vperm.xlu0 %1409, %v308
        %v1411 = vpop.permute.xlu0 %1410
        %v1413 = vmul.f32 %v1281, %v1367
        %v1414 = vmul.f32 %v1282, %v1367
        %v1415 = vmul.f32 %v1283, %v1367
        %v1416 = vmul.f32 %v1284, %v1367
        %v1417 = vmul.f32 %v1285, %v1367
        %v1418 = vmul.f32 %v1286, %v1367
        %v1419 = vmul.f32 %v1287, %v1367
        %v1420 = vmul.f32 %v1288, %v1371
        %v1421 = vmul.f32 %v1289, %v1371
        %v1422 = vmul.f32 %v1290, %v1371
        %v1423 = vmul.f32 %v1291, %v1371
        %v1424 = vmul.f32 %v1292, %v1371
        %v1425 = vmul.f32 %v1293, %v1371
        %v1426 = vmul.f32 %v1294, %v1371
        %v1427 = vmul.f32 %v1295, %v1375
        %v1428 = vmul.f32 %v1296, %v1375
        %v1429 = vmul.f32 %v1297, %v1375
        %v1430 = vmul.f32 %v1298, %v1375
        %v1431 = vmul.f32 %v1299, %v1375
        %v1432 = vmul.f32 %v1300, %v1375
        %v1433 = vmul.f32 %v1301, %v1375
        %v1434 = vmul.f32 %v1302, %v1379
        %v1435 = vmul.f32 %v1303, %v1379
        %v1436 = vmul.f32 %v1304, %v1379
        %v1437 = vmul.f32 %v1305, %v1379
        %v1438 = vmul.f32 %v1306, %v1379
        %v1439 = vmul.f32 %v1307, %v1379
        %v1440 = vmul.f32 %v1308, %v1379
        %v1441 = vmul.f32 %v1309, %v1383
        %v1442 = vmul.f32 %v1310, %v1383
        %v1443 = vmul.f32 %v1311, %v1383
        %v1444 = vmul.f32 %v1312, %v1383
        %v1445 = vmul.f32 %v1313, %v1383
        %v1446 = vmul.f32 %v1314, %v1383
        %v1447 = vmul.f32 %v1315, %v1383
        %v1448 = vmul.f32 %v1316, %v1387
        %v1449 = vmul.f32 %v1317, %v1387
        %v1450 = vmul.f32 %v1318, %v1387
        %v1451 = vmul.f32 %v1319, %v1387
        %v1452 = vmul.f32 %v1320, %v1387
        %v1453 = vmul.f32 %v1321, %v1387
        %v1454 = vmul.f32 %v1322, %v1387
        %v1455 = vmul.f32 %v1323, %v1391
        %v1456 = vmul.f32 %v1324, %v1391
        %v1457 = vmul.f32 %v1325, %v1391
        %v1458 = vmul.f32 %v1326, %v1391
        %v1459 = vmul.f32 %v1327, %v1391
        %v1460 = vmul.f32 %v1328, %v1391
        %v1461 = vmul.f32 %v1329, %v1391
        %v1462 = vmul.f32 %v1330, %v1395
        %v1463 = vmul.f32 %v1331, %v1395
        %v1464 = vmul.f32 %v1332, %v1395
        %v1465 = vmul.f32 %v1333, %v1395
        %v1466 = vmul.f32 %v1334, %v1395
        %v1467 = vmul.f32 %v1335, %v1395
        %v1468 = vmul.f32 %v1336, %v1395
        %v1469 = vmul.f32 %v1337, %v1399
        %v1470 = vmul.f32 %v1338, %v1399
        %v1471 = vmul.f32 %v1339, %v1399
        %v1472 = vmul.f32 %v1340, %v1399
        %v1473 = vmul.f32 %v1341, %v1399
        %v1474 = vmul.f32 %v1342, %v1399
        %v1475 = vmul.f32 %v1343, %v1399
        %v1476 = vmul.f32 %v1344, %v1403
        %v1477 = vmul.f32 %v1345, %v1403
        %v1478 = vmul.f32 %v1346, %v1403
        %v1479 = vmul.f32 %v1347, %v1403
        %v1480 = vmul.f32 %v1348, %v1403
        %v1481 = vmul.f32 %v1349, %v1403
        %v1482 = vmul.f32 %v1350, %v1403
        %v1483 = vmul.f32 %v1351, %v1407
        %v1484 = vmul.f32 %v1352, %v1407
        %v1485 = vmul.f32 %v1353, %v1407
        %v1486 = vmul.f32 %v1354, %v1407
        %v1487 = vmul.f32 %v1355, %v1407
        %v1488 = vmul.f32 %v1356, %v1407
        %v1489 = vmul.f32 %v1357, %v1407
        %v1490 = vmul.f32 %v1358, %v1411
        %v1491 = vmul.f32 %v1359, %v1411
        %v1492 = vmul.f32 %v1360, %v1411
        %v1493 = vmul.f32 %v1361, %v1411
        %v1494 = vmul.f32 %v1362, %v1411
        %v1495 = vmul.f32 %v1363, %v1411
        %v1496 = vmul.f32 %v1364, %v1411
        %1497 = vset.pattern.permute.xlu0 7
        %1498 = vperm.xlu0 %1497, %v297
        %v1499 = vpop.permute.xlu0 %1498
        %1501 = vset.pattern.permute.xlu0 7
        %1502 = vperm.xlu0 %1501, %v298
        %v1503 = vpop.permute.xlu0 %1502
        %1505 = vset.pattern.permute.xlu0 7
        %1506 = vperm.xlu0 %1505, %v299
        %v1507 = vpop.permute.xlu0 %1506
        %1509 = vset.pattern.permute.xlu0 7
        %1510 = vperm.xlu0 %1509, %v300
        %v1511 = vpop.permute.xlu0 %1510
        %1513 = vset.pattern.permute.xlu0 7
        %1514 = vperm.xlu0 %1513, %v301
        %v1515 = vpop.permute.xlu0 %1514
        %1517 = vset.pattern.permute.xlu0 7
        %1518 = vperm.xlu0 %1517, %v302
        %v1519 = vpop.permute.xlu0 %1518
        %1521 = vset.pattern.permute.xlu0 7
        %1522 = vperm.xlu0 %1521, %v303
        %v1523 = vpop.permute.xlu0 %1522
        %1525 = vset.pattern.permute.xlu0 7
        %1526 = vperm.xlu0 %1525, %v304
        %v1527 = vpop.permute.xlu0 %1526
        %1529 = vset.pattern.permute.xlu0 7
        %1530 = vperm.xlu0 %1529, %v305
        %v1531 = vpop.permute.xlu0 %1530
        %1533 = vset.pattern.permute.xlu0 7
        %1534 = vperm.xlu0 %1533, %v306
        %v1535 = vpop.permute.xlu0 %1534
        %1537 = vset.pattern.permute.xlu0 7
        %1538 = vperm.xlu0 %1537, %v307
        %v1539 = vpop.permute.xlu0 %1538
        %1541 = vset.pattern.permute.xlu0 7
        %1542 = vperm.xlu0 %1541, %v308
        %v1543 = vpop.permute.xlu0 %1542
        %v1545 = vadd.f32 %v1413, %v1499
        %v1546 = vadd.f32 %v1414, %v1499
        %v1547 = vadd.f32 %v1415, %v1499
        %v1548 = vadd.f32 %v1416, %v1499
        %v1549 = vadd.f32 %v1417, %v1499
        %v1550 = vadd.f32 %v1418, %v1499
        %v1551 = vadd.f32 %v1419, %v1499
        %v1552 = vadd.f32 %v1420, %v1503
        %v1553 = vadd.f32 %v1421, %v1503
        %v1554 = vadd.f32 %v1422, %v1503
        %v1555 = vadd.f32 %v1423, %v1503
        %v1556 = vadd.f32 %v1424, %v1503
        %v1557 = vadd.f32 %v1425, %v1503
        %v1558 = vadd.f32 %v1426, %v1503
        %v1559 = vadd.f32 %v1427, %v1507
        %v1560 = vadd.f32 %v1428, %v1507
        %v1561 = vadd.f32 %v1429, %v1507
        %v1562 = vadd.f32 %v1430, %v1507
        %v1563 = vadd.f32 %v1431, %v1507
        %v1564 = vadd.f32 %v1432, %v1507
        %v1565 = vadd.f32 %v1433, %v1507
        %v1566 = vadd.f32 %v1434, %v1511
        %v1567 = vadd.f32 %v1435, %v1511
        %v1568 = vadd.f32 %v1436, %v1511
        %v1569 = vadd.f32 %v1437, %v1511
        %v1570 = vadd.f32 %v1438, %v1511
        %v1571 = vadd.f32 %v1439, %v1511
        %v1572 = vadd.f32 %v1440, %v1511
        %v1573 = vadd.f32 %v1441, %v1515
        %v1574 = vadd.f32 %v1442, %v1515
        %v1575 = vadd.f32 %v1443, %v1515
        %v1576 = vadd.f32 %v1444, %v1515
        %v1577 = vadd.f32 %v1445, %v1515
        %v1578 = vadd.f32 %v1446, %v1515
        %v1579 = vadd.f32 %v1447, %v1515
        %v1580 = vadd.f32 %v1448, %v1519
        %v1581 = vadd.f32 %v1449, %v1519
        %v1582 = vadd.f32 %v1450, %v1519
        %v1583 = vadd.f32 %v1451, %v1519
        %v1584 = vadd.f32 %v1452, %v1519
        %v1585 = vadd.f32 %v1453, %v1519
        %v1586 = vadd.f32 %v1454, %v1519
        %v1587 = vadd.f32 %v1455, %v1523
        %v1588 = vadd.f32 %v1456, %v1523
        %v1589 = vadd.f32 %v1457, %v1523
        %v1590 = vadd.f32 %v1458, %v1523
        %v1591 = vadd.f32 %v1459, %v1523
        %v1592 = vadd.f32 %v1460, %v1523
        %v1593 = vadd.f32 %v1461, %v1523
        %v1594 = vadd.f32 %v1462, %v1527
        %v1595 = vadd.f32 %v1463, %v1527
        %v1596 = vadd.f32 %v1464, %v1527
        %v1597 = vadd.f32 %v1465, %v1527
        %v1598 = vadd.f32 %v1466, %v1527
        %v1599 = vadd.f32 %v1467, %v1527
        %v1600 = vadd.f32 %v1468, %v1527
        %v1601 = vadd.f32 %v1469, %v1531
        %v1602 = vadd.f32 %v1470, %v1531
        %v1603 = vadd.f32 %v1471, %v1531
        %v1604 = vadd.f32 %v1472, %v1531
        %v1605 = vadd.f32 %v1473, %v1531
        %v1606 = vadd.f32 %v1474, %v1531
        %v1607 = vadd.f32 %v1475, %v1531
        %v1608 = vadd.f32 %v1476, %v1535
        %v1609 = vadd.f32 %v1477, %v1535
        %v1610 = vadd.f32 %v1478, %v1535
        %v1611 = vadd.f32 %v1479, %v1535
        %v1612 = vadd.f32 %v1480, %v1535
        %v1613 = vadd.f32 %v1481, %v1535
        %v1614 = vadd.f32 %v1482, %v1535
        %v1615 = vadd.f32 %v1483, %v1539
        %v1616 = vadd.f32 %v1484, %v1539
        %v1617 = vadd.f32 %v1485, %v1539
        %v1618 = vadd.f32 %v1486, %v1539
        %v1619 = vadd.f32 %v1487, %v1539
        %v1620 = vadd.f32 %v1488, %v1539
        %v1621 = vadd.f32 %v1489, %v1539
        %v1622 = vadd.f32 %v1490, %v1543
        %v1623 = vadd.f32 %v1491, %v1543
        %v1624 = vadd.f32 %v1492, %v1543
        %v1625 = vadd.f32 %v1493, %v1543
        %v1626 = vadd.f32 %v1494, %v1543
        %v1627 = vadd.f32 %v1495, %v1543
        %v1628 = vadd.f32 %v1496, %v1543
        %v1629 = vtanh.pop %v1545
        %v1630 = vtanh.pop %v1546
        %v1631 = vtanh.pop %v1547
        %v1632 = vtanh.pop %v1548
        %v1633 = vtanh.pop %v1549
        %v1634 = vtanh.pop %v1550
        %v1635 = vtanh.pop %v1551
        %v1636 = vtanh.pop %v1552
        %v1637 = vtanh.pop %v1553
        %v1638 = vtanh.pop %v1554
        %v1639 = vtanh.pop %v1555
        %v1640 = vtanh.pop %v1556
        %v1641 = vtanh.pop %v1557
        %v1642 = vtanh.pop %v1558
        %v1643 = vtanh.pop %v1559
        %v1644 = vtanh.pop %v1560
        %v1645 = vtanh.pop %v1561
        %v1646 = vtanh.pop %v1562
        %v1647 = vtanh.pop %v1563
        %v1648 = vtanh.pop %v1564
        %v1649 = vtanh.pop %v1565
        %v1650 = vtanh.pop %v1566
        %v1651 = vtanh.pop %v1567
        %v1652 = vtanh.pop %v1568
        %v1653 = vtanh.pop %v1569
        %v1654 = vtanh.pop %v1570
        %v1655 = vtanh.pop %v1571
        %v1656 = vtanh.pop %v1572
        %v1657 = vtanh.pop %v1573
        %v1658 = vtanh.pop %v1574
        %v1659 = vtanh.pop %v1575
        %v1660 = vtanh.pop %v1576
        %v1661 = vtanh.pop %v1577
        %v1662 = vtanh.pop %v1578
        %v1663 = vtanh.pop %v1579
        %v1664 = vtanh.pop %v1580
        %v1665 = vtanh.pop %v1581
        %v1666 = vtanh.pop %v1582
        %v1667 = vtanh.pop %v1583
        %v1668 = vtanh.pop %v1584
        %v1669 = vtanh.pop %v1585
        %v1670 = vtanh.pop %v1586
        %v1671 = vtanh.pop %v1587
        %v1672 = vtanh.pop %v1588
        %v1673 = vtanh.pop %v1589
        %v1674 = vtanh.pop %v1590
        %v1675 = vtanh.pop %v1591
        %v1676 = vtanh.pop %v1592
        %v1677 = vtanh.pop %v1593
        %v1678 = vtanh.pop %v1594
        %v1679 = vtanh.pop %v1595
        %v1680 = vtanh.pop %v1596
        %v1681 = vtanh.pop %v1597
        %v1682 = vtanh.pop %v1598
        %v1683 = vtanh.pop %v1599
        %v1684 = vtanh.pop %v1600
        %v1685 = vtanh.pop %v1601
        %v1686 = vtanh.pop %v1602
        %v1687 = vtanh.pop %v1603
        %v1688 = vtanh.pop %v1604
        %v1689 = vtanh.pop %v1605
        %v1690 = vtanh.pop %v1606
        %v1691 = vtanh.pop %v1607
        %v1692 = vtanh.pop %v1608
        %v1693 = vtanh.pop %v1609
        %v1694 = vtanh.pop %v1610
        %v1695 = vtanh.pop %v1611
        %v1696 = vtanh.pop %v1612
        %v1697 = vtanh.pop %v1613
        %v1698 = vtanh.pop %v1614
        %v1699 = vtanh.pop %v1615
        %v1700 = vtanh.pop %v1616
        %v1701 = vtanh.pop %v1617
        %v1702 = vtanh.pop %v1618
        %v1703 = vtanh.pop %v1619
        %v1704 = vtanh.pop %v1620
        %v1705 = vtanh.pop %v1621
        %v1706 = vtanh.pop %v1622
        %v1707 = vtanh.pop %v1623
        %v1708 = vtanh.pop %v1624
        %v1709 = vtanh.pop %v1625
        %v1710 = vtanh.pop %v1626
        %v1711 = vtanh.pop %v1627
        %v1712 = vtanh.pop %v1628
        %1713 = vst [vmem:[%s200] sm:$0xff] %v1629
        %1714 = vst [vmem:[%s200 + $0x8] sm:$0xff] %v1630
        %1715 = vst [vmem:[%s200 + $0x10] sm:$0xff] %v1631
        %1716 = vst [vmem:[%s200 + $0x18] sm:$0xff] %v1632
        %1717 = vst [vmem:[%s200 + $0x20] sm:$0xff] %v1633
        %1718 = vst [vmem:[%s200 + $0x28] sm:$0xff] %v1634
        %vm1719 = vcmask 130048
        %1720 = vst.msk [vmem:[%s200 + $0x30] sm:$0xff] %vm1719, %v1635
        %1721 = vst [vmem:[%s200 + $0x38] sm:$0xff] %v1636
        %1722 = vst [vmem:[%s200 + $0x40] sm:$0xff] %v1637
        %1723 = vst [vmem:[%s200 + $0x48] sm:$0xff] %v1638
        %1724 = vst [vmem:[%s200 + $0x50] sm:$0xff] %v1639
        %1725 = vst [vmem:[%s200 + $0x58] sm:$0xff] %v1640
        %1726 = vst [vmem:[%s200 + $0x60] sm:$0xff] %v1641
        %1727 = vst.msk [vmem:[%s200 + $0x68] sm:$0xff] %vm1719, %v1642
        %1728 = vst [vmem:[%s200 + $0x70] sm:$0xff] %v1643
        %1729 = vst [vmem:[%s200 + $0x78] sm:$0xff] %v1644
        %1730 = vst [vmem:[%s200 + $0x80] sm:$0xff] %v1645
        %1731 = vst [vmem:[%s200 + $0x88] sm:$0xff] %v1646
        %1732 = vst [vmem:[%s200 + $0x90] sm:$0xff] %v1647
        %1733 = vst [vmem:[%s200 + $0x98] sm:$0xff] %v1648
        %1734 = vst.msk [vmem:[%s200 + $0xa0] sm:$0xff] %vm1719, %v1649
        %1735 = vst [vmem:[%s200 + $0xa8] sm:$0xff] %v1650
        %1736 = vst [vmem:[%s200 + $0xb0] sm:$0xff] %v1651
        %1737 = vst [vmem:[%s200 + $0xb8] sm:$0xff] %v1652
        %1738 = vst [vmem:[%s200 + $0xc0] sm:$0xff] %v1653
        %1739 = vst [vmem:[%s200 + $0xc8] sm:$0xff] %v1654
        %1740 = vst [vmem:[%s200 + $0xd0] sm:$0xff] %v1655
        %1741 = vst.msk [vmem:[%s200 + $0xd8] sm:$0xff] %vm1719, %v1656
        %1742 = vst [vmem:[%s200 + $0xe0] sm:$0xff] %v1657
        %1743 = vst [vmem:[%s200 + $0xe8] sm:$0xff] %v1658
        %1744 = vst [vmem:[%s200 + $0xf0] sm:$0xff] %v1659
        %1745 = vst [vmem:[%s200 + $0xf8] sm:$0xff] %v1660
        %1746 = vst [vmem:[%s200 + $0x100] sm:$0xff] %v1661
        %1747 = vst [vmem:[%s200 + $0x108] sm:$0xff] %v1662
        %1748 = vst.msk [vmem:[%s200 + $0x110] sm:$0xff] %vm1719, %v1663
        %1749 = vst [vmem:[%s200 + $0x118] sm:$0xff] %v1664
        %1750 = vst [vmem:[%s200 + $0x120] sm:$0xff] %v1665
        %1751 = vst [vmem:[%s200 + $0x128] sm:$0xff] %v1666
        %1752 = vst [vmem:[%s200 + $0x130] sm:$0xff] %v1667
        %1753 = vst [vmem:[%s200 + $0x138] sm:$0xff] %v1668
        %1754 = vst [vmem:[%s200 + $0x140] sm:$0xff] %v1669
        %1755 = vst.msk [vmem:[%s200 + $0x148] sm:$0xff] %vm1719, %v1670
        %1756 = vst [vmem:[%s200 + $0x150] sm:$0xff] %v1671
        %1757 = vst [vmem:[%s200 + $0x158] sm:$0xff] %v1672
        %1758 = vst [vmem:[%s200 + $0x160] sm:$0xff] %v1673
        %1759 = vst [vmem:[%s200 + $0x168] sm:$0xff] %v1674
        %1760 = vst [vmem:[%s200 + $0x170] sm:$0xff] %v1675
        %1761 = vst [vmem:[%s200 + $0x178] sm:$0xff] %v1676
        %1762 = vst.msk [vmem:[%s200 + $0x180] sm:$0xff] %vm1719, %v1677
        %1763 = vst [vmem:[%s200 + $0x188] sm:$0xff] %v1678
        %1764 = vst [vmem:[%s200 + $0x190] sm:$0xff] %v1679
        %1765 = vst [vmem:[%s200 + $0x198] sm:$0xff] %v1680
        %1766 = vst [vmem:[%s200 + $0x1a0] sm:$0xff] %v1681
        %1767 = vst [vmem:[%s200 + $0x1a8] sm:$0xff] %v1682
        %1768 = vst [vmem:[%s200 + $0x1b0] sm:$0xff] %v1683
        %1769 = vst.msk [vmem:[%s200 + $0x1b8] sm:$0xff] %vm1719, %v1684
        %1770 = vst [vmem:[%s200 + $0x1c0] sm:$0xff] %v1685
        %1771 = vst [vmem:[%s200 + $0x1c8] sm:$0xff] %v1686
        %1772 = vst [vmem:[%s200 + $0x1d0] sm:$0xff] %v1687
        %1773 = vst [vmem:[%s200 + $0x1d8] sm:$0xff] %v1688
        %1774 = vst [vmem:[%s200 + $0x1e0] sm:$0xff] %v1689
        %1775 = vst [vmem:[%s200 + $0x1e8] sm:$0xff] %v1690
        %1776 = vst.msk [vmem:[%s200 + $0x1f0] sm:$0xff] %vm1719, %v1691
        %1777 = vst [vmem:[%s200 + $0x1f8] sm:$0xff] %v1692
        %1778 = vst [vmem:[%s200 + $0x200] sm:$0xff] %v1693
        %1779 = vst [vmem:[%s200 + $0x208] sm:$0xff] %v1694
        %1780 = vst [vmem:[%s200 + $0x210] sm:$0xff] %v1695
        %1781 = vst [vmem:[%s200 + $0x218] sm:$0xff] %v1696
        %1782 = vst [vmem:[%s200 + $0x220] sm:$0xff] %v1697
        %1783 = vst.msk [vmem:[%s200 + $0x228] sm:$0xff] %vm1719, %v1698
        %1784 = vst [vmem:[%s200 + $0x230] sm:$0xff] %v1699
        %1785 = vst [vmem:[%s200 + $0x238] sm:$0xff] %v1700
        %1786 = vst [vmem:[%s200 + $0x240] sm:$0xff] %v1701
        %1787 = vst [vmem:[%s200 + $0x248] sm:$0xff] %v1702
        %1788 = vst [vmem:[%s200 + $0x250] sm:$0xff] %v1703
        %1789 = vst [vmem:[%s200 + $0x258] sm:$0xff] %v1704
        %1790 = vst.msk [vmem:[%s200 + $0x260] sm:$0xff] %vm1719, %v1705
        %1791 = vst [vmem:[%s200 + $0x268] sm:$0xff] %v1706
        %1792 = vst [vmem:[%s200 + $0x270] sm:$0xff] %v1707
        %1793 = vst [vmem:[%s200 + $0x278] sm:$0xff] %v1708
        %1794 = vst [vmem:[%s200 + $0x280] sm:$0xff] %v1709
        %1795 = vst [vmem:[%s200 + $0x288] sm:$0xff] %v1710
        %1796 = vst [vmem:[%s200 + $0x290] sm:$0xff] %v1711
        %1797 = vst.msk [vmem:[%s200 + $0x298] sm:$0xff] %vm1719, %v1712
        %s1798 = sand.u32 %s99, 1
        %s1799 = scalar_lea.sflag [#allocation4], %s1798
        %s1800 = sand.u32 %s99, 1
        %s1801 = smul.addr %s1800, 672
        %s1802 = scalar_lea.vmem [#allocation5], %s1801
        // Predicated region
        $region33: #{tpu_custom_call.1} parent=27 // pred_check
          %p1803 = pneg %p109
        $region34: #{tpu_custom_call.1} parent=27 // pred_check_branch
          %1805 = sbr.rel (%p1803) target = $region36
        $region35: #{tpu_custom_call.1} parent=27 // pred_region
          %s1806 = smul.u32 %s23, 2
          %s1807 = sadd.s32 %s1806, %s24
          %s1808 = smul.u32 12, %s1807
          %s1810 = ssub.s32 10752, 10752
          %1811 = vsyncadd %s1799, %s1810
          %s1812 = smul.addr %s1808, 7
          %s1813 = smul.addr %s1812, 128
          %s1814 = scalar_lea.hbm %s2, %s1813
          %s1815 = sshll.u32 %s1802, 4
          %s1816 = int_to_ptr.vmem [resolvable:$true] %s1815
          %1821 = dma.vmem_to_hbm [thread:$0]  %s1816, 10752, %s1814, %s1799, 896, 896, 56
        $region36: #{tpu_custom_call.1} parent=27 // pred_fallthru
          _
      $region28: #{tpu_custom_call.1} parent=5 // pred_fallthru
        _
      %p1822 = scmp.le.s32.totalorder 2, %s14
      // Predicated region
      $region37: #{tpu_custom_call.1} parent=5 // pred_check
        %p1823 = pneg %p1822
      $region38: #{tpu_custom_call.1} parent=5 // pred_check_branch
        %1825 = sbr.rel (%p1823) target = $region40
      $region39: #{tpu_custom_call.1} parent=5 // pred_region
        %s1826 = ssub.s32 %s14, 2
        // Predicated region
        $region41: #{tpu_custom_call.1} parent=39 // pred_check
          %p1827 = pneg %p115
        $region42: #{tpu_custom_call.1} parent=39 // pred_check_branch
          %1829 = sbr.rel (%p1827) target = $region44
        $region43: #{tpu_custom_call.1} parent=39 // pred_region
          %s1830 = sand.u32 %s100, 1
          %s1831 = scalar_lea.sflag [#allocation4], %s1830
          %s1832 = sand.u32 %s100, 1
          %s1833 = smul.addr %s1832, 672
          %s1834 = scalar_lea.vmem [#allocation5], %s1833
          %1835 = dma.done %s1831, 10752
        $region44: #{tpu_custom_call.1} parent=39 // pred_fallthru
          _
      $region40: #{tpu_custom_call.1} parent=5 // pred_fallthru
        _
    $region6: #{tpu_custom_call.1} parent=1 // loop_footer
      %s18 = sadd.s32 1, %s14
    $region7: #{tpu_custom_call.1} parent=1 // loop_footer_branch
      %13 = sbr.rel target = $region3
    $region8: #{tpu_custom_call.1} parent=1 // loop_exit
      _
    %1836 = vsyncpa [#allocation3], 1
    %s1837 = scalar_lea.sflag [#allocation3], 1
    %1838 = vsyncpa %s1837, 1
    %1839 = vsyncpa [#allocation4], 1
    %s1840 = scalar_lea.sflag [#allocation4], 1
    %1841 = vsyncpa %s1840, 1

</llo_original>
